<compile_context>
chip_gen: v5e
topology: v5e:2x2
jax: 0.10.0
libtpu: 0.0.40
codegen_flags: <defaults>
</compile_context>

<pallas_src>
import math

import jax
import jax.numpy as jnp
from jax import lax
from jax.experimental import pallas as pl
from jax.experimental.pallas import tpu as pltpu

# ----------------------- synthetic (small) hyper-params ----------------------
BATCH = 2
C_IN = 3
IMG = 16
PATCH = 8
NUM_PATCHES = (IMG // PATCH) ** 2          # 4
TOKENS = NUM_PATCHES + 1                   # 5 (cls + patches)
T_PAD = 8                                  # tokens padded to the f32 sublane tile
ROWS = BATCH * T_PAD                       # 16 token rows in the fused slab
EMBED_DIM = 32                             # ViT width (real DeiT-base: 768)
NUM_HEADS = 4
HEAD_DIM = EMBED_DIM // NUM_HEADS          # 8
DEPTH = 2                                  # real DeiT-base: 12
MLP_DIM = 4 * EMBED_DIM                    # 128 (lane-dense MLP hidden)
NUM_CLASSES = 16                           # vit.head.out_features (real: 1000)
EMBED_SIZE = 32                            # Encoder(embed_size)
PATCH_FEATS = C_IN * PATCH * PATCH         # 192
LN_EPS = 1e-6                              # timm ViT LayerNorm eps
BN_EPS = 1e-5                              # nn.BatchNorm1d eps
NEG_INF = -1e30


# --------------------------- in-kernel value helpers --------------------------
def _ln(x, g, b, eps=LN_EPS):
    x = x.astype(jnp.float32)
    mean = jnp.mean(x, axis=-1, keepdims=True)
    var = jnp.mean(jnp.square(x - mean), axis=-1, keepdims=True)
    return (x - mean) * lax.rsqrt(var + eps) * g + b


def _gelu(x):
    # TODO(synk): PyTorch nn.GELU defaults to the exact erf form; the tanh
    # approximation is used here to keep the Mosaic op set minimal.
    # Micro-opt: reuse x*x, fold the 0.5 into the tanh epilogue; the tanh
    # itself lands on the EUP (free slot), the muls are VALU.
    c = math.sqrt(2.0 / math.pi)
    x2 = x * x
    u = c * x * (1.0 + 0.044715 * x2)
    return x * (0.5 + 0.5 * jnp.tanh(u))


def _mm(x, w, b):
    # bf16 MXU operands, f32 accumulation, f32 bias/epilogue.
    return jnp.dot(x.astype(w.dtype), w, preferred_element_type=jnp.float32) + b


# ------------------------------ fused kernel ----------------------------------
def _encoder_kernel(
    patches_ref, attn_mask_ref, tok_add_ref, patch_w_ref,
    ln1_g_ref, ln1_b_ref, qkv_w_ref, qkv_b_ref, proj_w_ref, proj_b_ref,
    ln2_g_ref, ln2_b_ref, fc1_w_ref, fc1_b_ref, fc2_w_ref, fc2_b_ref,
    lnf_g_ref, lnf_b_ref, head_w_ref, head_b_ref,
    embed_w_ref, embed_b_ref, bn_g_ref, bn_b_ref, bn_rm_ref, bn_rv_ref,
    out_ref,
):
    D, Dh, H, Tp = EMBED_DIM, HEAD_DIM, NUM_HEADS, T_PAD

    # Precomputed [ROWS, ROWS] block-diagonal mask: 0 where (same image AND
    # key slot < TOKENS), NEG_INF otherwise.  Lets attention run on the full
    # batch slab in one set of matmuls per head.
    attn_mask = attn_mask_ref[...]

    # Patch embedding (conv-as-matmul on host-unfolded patches).  Cls/pad rows
    # of `patches` are zero, so the matmul leaves them zero and `tok_add`
    # supplies (cls_token + pos[0]) / (patch_bias + pos[1:]) per row.
    x = _mm(patches_ref[...], patch_w_ref[...], tok_add_ref[...])   # [ROWS, D]

    for l in range(DEPTH):                       # fully unrolled (static depth)
        # ---- multi-head self-attention (pre-LN), whole-batch slab ----
        h = _ln(x, ln1_g_ref[l], ln1_b_ref[l])
        qkv = _mm(h, qkv_w_ref[l], qkv_b_ref[l])                  # [ROWS, 3D] f32
        qkv_bf = qkv.astype(jnp.bfloat16)                          # single cast, reused
        heads = []
        for hd in range(H):
            q = qkv_bf[:, hd * Dh:(hd + 1) * Dh]                   # scale folded into W_q
            k = qkv_bf[:, D + hd * Dh:D + (hd + 1) * Dh]
            v = qkv_bf[:, 2 * D + hd * Dh:2 * D + (hd + 1) * Dh]
            s = lax.dot_general(                                   # q @ k^T over full slab
                q, k, (((1,), (1,)), ((), ())),
                preferred_element_type=jnp.float32)                # [ROWS, ROWS]
            s = s + attn_mask
            s = s - jnp.max(s, axis=-1, keepdims=True)
            p = jnp.exp(s)
            p = p * pl.reciprocal(jnp.sum(p, axis=-1, keepdims=True),
                                  approx=True)
            heads.append(jnp.dot(p.astype(jnp.bfloat16), v,
                                 preferred_element_type=jnp.float32))  # [ROWS, Dh]
        # Heads are contiguous 8-lane segments -> one fused output projection.
        o_cat = jnp.concatenate(heads, axis=-1)                    # [ROWS, D] f32
        x = x + _mm(o_cat, proj_w_ref[l], proj_b_ref[l])           # fused residual

        # ---- MLP (pre-LN), 128-wide lane-dense hidden ----
        h = _ln(x, ln2_g_ref[l], ln2_b_ref[l])
        h = _gelu(_mm(h, fc1_w_ref[l], fc1_b_ref[l]))              # [ROWS, MLP_DIM]
        x = x + _mm(h, fc2_w_ref[l], fc2_b_ref[l])                 # fused residual

    # ---- cls pooling (rows 0 and T_PAD), final LN, class head ----
    cls = jnp.concatenate([x[b * Tp:b * Tp + 1, :] for b in range(BATCH)], axis=0)
    cls = _ln(cls, lnf_g_ref[...], lnf_b_ref[...])                 # [B, D]
    logits = _mm(cls, head_w_ref[...], head_b_ref[...])            # [B, NUM_CLASSES]

    # ---- embed head: Linear -> GELU -> BatchNorm1d (eval running stats) ----
    e = _gelu(_mm(logits, embed_w_ref[...], embed_b_ref[...]))     # [B, EMBED_SIZE]
    e = (e - bn_rm_ref[...]) * lax.rsqrt(bn_rv_ref[...] + BN_EPS)
    e = e * bn_g_ref[...] + bn_b_ref[...]
    # Dropout(0.1): identity in eval.  TODO(synk): training-mode dropout would
    # use pltpu.prng_seed + pltpu.prng_random_bits masking.
    out_ref[...] = e.astype(out_ref.dtype)


# ------------------------------ host wrapper -----------------------------------
_PACKED_ORDER = (
    "attn_mask", "tok_add", "patch_w",
    "ln1_g", "ln1_b", "qkv_w", "qkv_b", "proj_w", "proj_b",
    "ln2_g", "ln2_b", "fc1_w", "fc1_b", "fc2_w", "fc2_b",
    "lnf_g", "lnf_b", "head_w", "head_b",
    "embed_w", "embed_b", "bn_g", "bn_b", "bn_rm", "bn_rv",
)


def _vmem_spec():
    return pl.BlockSpec(memory_space=pltpu.MemorySpace.VMEM)


@jax.jit
def encoder_forward(images, packed):
    """Single fused pallas_call: DeiT backbone + embed head (inference)."""
    B = images.shape[0]            # must equal BATCH (kernel is specialized)
    # Host-side input prep only: unfold NCHW images into per-patch rows
    # ((c, kh, kw) flattening == conv weight layout), padded so each image
    # owns T_PAD sublane-aligned token rows (row 0 = cls slot, 1..NP = patches).
    p = images.reshape(B, C_IN, IMG // PATCH, PATCH, IMG // PATCH, PATCH)
    p = p.transpose(0, 2, 4, 1, 3, 5).reshape(B, NUM_PATCHES, PATCH_FEATS)
    p = jnp.pad(p, ((0, 0), (1, T_PAD - NUM_PATCHES - 1), (0, 0)))
    patches = p.reshape(B * T_PAD, PATCH_FEATS)

    args = [patches] + [packed[k] for k in _PACKED_ORDER]
    # torch.no_grad() around the ViT: inference-only forward; no gradients are
    # taken through this pallas_call.
    return pl.pallas_call(
        _encoder_kernel,
        out_shape=jax.ShapeDtypeStruct((B, EMBED_SIZE), jnp.float32),
        in_specs=[_vmem_spec() for _ in args],
        out_specs=_vmem_spec(),
        # Explicit scoped-VMEM limit so a scaled-up variant behaves the same on
        # v5e (16 MiB default) as on v6e/v7x (32 MiB default).
        compiler_params=pltpu.CompilerParams(vmem_limit_bytes=32 * 1024 * 1024),
    )(*args)


# ------------------------------ parameter setup --------------------------------
def init_params(key):
    """Synthetic PyTorch-layout parameters (f32)."""
    keys = iter(jax.random.split(key, 16 + DEPTH * 8))

    def nrm(shape, scale=0.02):
        return (scale * jax.random.normal(next(keys), shape)).astype(jnp.float32)

    zeros = lambda s: jnp.zeros(s, jnp.float32)
    ones = lambda s: jnp.ones(s, jnp.float32)

    blocks = []
    for _ in range(DEPTH):
        blocks.append(dict(
            ln1_g=ones((EMBED_DIM,)), ln1_b=zeros((EMBED_DIM,)),
            qkv_w=nrm((EMBED_DIM, 3 * EMBED_DIM)), qkv_b=zeros((3 * EMBED_DIM,)),
            proj_w=nrm((EMBED_DIM, EMBED_DIM)), proj_b=zeros((EMBED_DIM,)),
            ln2_g=ones((EMBED_DIM,)), ln2_b=zeros((EMBED_DIM,)),
            fc1_w=nrm((EMBED_DIM, MLP_DIM)), fc1_b=zeros((MLP_DIM,)),
            fc2_w=nrm((MLP_DIM, EMBED_DIM)), fc2_b=zeros((EMBED_DIM,)),
        ))
    return dict(
        patch_w=nrm((PATCH_FEATS, EMBED_DIM)), patch_b=zeros((EMBED_DIM,)),
        cls_token=nrm((1, EMBED_DIM)), pos_embed=nrm((TOKENS, EMBED_DIM)),
        blocks=blocks,
        lnf_g=ones((EMBED_DIM,)), lnf_b=zeros((EMBED_DIM,)),
        head_w=nrm((EMBED_DIM, NUM_CLASSES)), head_b=zeros((NUM_CLASSES,)),
        embed_w=nrm((NUM_CLASSES, EMBED_SIZE)), embed_b=zeros((EMBED_SIZE,)),
        bn_g=ones((EMBED_SIZE,)), bn_b=zeros((EMBED_SIZE,)),
        bn_rm=zeros((EMBED_SIZE,)), bn_rv=ones((EMBED_SIZE,)),   # eval running stats
    )


def pack_params(p):
    """All layout work at pack time: stack per-block weights, fold the
    attention scale into W_q/b_q, cast every MXU weight (incl. proj_w) to
    bf16, precompute the token add-slab and the block-diagonal attention
    mask."""
    D = EMBED_DIM
    scale = HEAD_DIM ** -0.5

    def stack(name):
        return jnp.stack([blk[name] for blk in p["blocks"]], axis=0)

    wcast = lambda w: w.astype(jnp.bfloat16)
    vec = lambda v: v.reshape(1, -1).astype(jnp.float32)
    vecs = lambda name: stack(name).reshape(DEPTH, 1, -1).astype(jnp.float32)

    # softmax((q*s) k^T) == softmax(s * (q k^T)): exact algebraic fold.
    qkv_w = stack("qkv_w").at[:, :, :D].multiply(scale)
    qkv_b = stack("qkv_b").at[:, :D].multiply(scale)

    # Additive token slab: row0 = cls+pos[0], rows 1..NP = patch_bias+pos[1:],
    # pad rows = 0; tiled over the batch.
    tok_add = jnp.zeros((T_PAD, D), jnp.float32)
    tok_add = tok_add.at[0].set(p["cls_token"][0] + p["pos_embed"][0])
    tok_add = tok_add.at[1:TOKENS].set(p["patch_b"][None, :] + p["pos_embed"][1:])
    tok_add = jnp.tile(tok_add, (BATCH, 1))

    # Block-diagonal attention mask over the fused batch slab: key must belong
    # to the same image as the query and lie in a real (non-pad) token slot.
    r = jnp.arange(ROWS)
    same_img = (r[:, None] // T_PAD) == (r[None, :] // T_PAD)
    valid_key = (r[None, :] % T_PAD) < TOKENS
    attn_mask = jnp.where(same_img & valid_key, 0.0, NEG_INF).astype(jnp.float32)

    return dict(
        attn_mask=attn_mask,
        tok_add=tok_add,
        patch_w=wcast(p["patch_w"]),
        ln1_g=vecs("ln1_g"), ln1_b=vecs("ln1_b"),
        qkv_w=wcast(qkv_w),
        qkv_b=qkv_b.reshape(DEPTH, 1, -1).astype(jnp.float32),
        proj_w=wcast(stack("proj_w")),            # bf16; indexed on leading axis only
        proj_b=vecs("proj_b"),
        ln2_g=vecs("ln2_g"), ln2_b=vecs("ln2_b"),
        fc1_w=wcast(stack("fc1_w")), fc1_b=vecs("fc1_b"),
        fc2_w=wcast(stack("fc2_w")), fc2_b=vecs("fc2_b"),
        lnf_g=vec(p["lnf_g"]), lnf_b=vec(p["lnf_b"]),
        head_w=wcast(p["head_w"]), head_b=vec(p["head_b"]),
        embed_w=wcast(p["embed_w"]), embed_b=vec(p["embed_b"]),
        bn_g=vec(p["bn_g"]), bn_b=vec(p["bn_b"]),
        bn_rm=vec(p["bn_rm"]), bn_rv=vec(p["bn_rv"]),
    )


# ----------------------------------- main --------------------------------------
if __name__ == "__main__":
    root = jax.random.PRNGKey(0)
    k_img, k_par = jax.random.split(root)
    images = jax.random.normal(k_img, (BATCH, C_IN, IMG, IMG), dtype=jnp.float32)
    packed = pack_params(init_params(k_par))

    out = encoder_forward(images, packed)
    out = jax.block_until_ready(out)

    assert out.shape == (BATCH, EMBED_SIZE), out.shape
    assert bool(jnp.all(jnp.isfinite(out)))
    print("KERNEL_OK")
</pallas_src>

<mosaic_0001>
module attributes {stable_mosaic.version = 11 : i64} {
  func.func @_encoder_kernel(%arg0: memref<16x192xf32, #tpu.memory_space<vmem>>, %arg1: memref<16x16xf32, #tpu.memory_space<vmem>>, %arg2: memref<16x32xf32, #tpu.memory_space<vmem>>, %arg3: memref<192x32xbf16, #tpu.memory_space<vmem>>, %arg4: memref<2x1x32xf32, #tpu.memory_space<vmem>>, %arg5: memref<2x1x32xf32, #tpu.memory_space<vmem>>, %arg6: memref<2x32x96xbf16, #tpu.memory_space<vmem>>, %arg7: memref<2x1x96xf32, #tpu.memory_space<vmem>>, %arg8: memref<2x32x32xbf16, #tpu.memory_space<vmem>>, %arg9: memref<2x1x32xf32, #tpu.memory_space<vmem>>, %arg10: memref<2x1x32xf32, #tpu.memory_space<vmem>>, %arg11: memref<2x1x32xf32, #tpu.memory_space<vmem>>, %arg12: memref<2x32x128xbf16, #tpu.memory_space<vmem>>, %arg13: memref<2x1x128xf32, #tpu.memory_space<vmem>>, %arg14: memref<2x128x32xbf16, #tpu.memory_space<vmem>>, %arg15: memref<2x1x32xf32, #tpu.memory_space<vmem>>, %arg16: memref<1x32xf32, #tpu.memory_space<vmem>>, %arg17: memref<1x32xf32, #tpu.memory_space<vmem>>, %arg18: memref<32x16xbf16, #tpu.memory_space<vmem>>, %arg19: memref<1x16xf32, #tpu.memory_space<vmem>>, %arg20: memref<16x32xbf16, #tpu.memory_space<vmem>>, %arg21: memref<1x32xf32, #tpu.memory_space<vmem>>, %arg22: memref<1x32xf32, #tpu.memory_space<vmem>>, %arg23: memref<1x32xf32, #tpu.memory_space<vmem>>, %arg24: memref<1x32xf32, #tpu.memory_space<vmem>>, %arg25: memref<1x32xf32, #tpu.memory_space<vmem>>, %arg26: memref<2x32xf32, #tpu.memory_space<vmem>>) attributes {dimension_semantics = [], scalar_prefetch = 0 : i64, scratch_operands = 0 : i64, tpu.core_type = #tpu.core_type<tc>} {
    %c0 = arith.constant 0 : index
    %c0_0 = arith.constant 0 : index
    %0 = vector.load %arg1[%c0, %c0_0] : memref<16x16xf32, #tpu.memory_space<vmem>>, vector<16x16xf32>
    %c0_1 = arith.constant 0 : index
    %c0_2 = arith.constant 0 : index
    %1 = vector.load %arg0[%c0_1, %c0_2] : memref<16x192xf32, #tpu.memory_space<vmem>>, vector<16x192xf32>
    %c0_3 = arith.constant 0 : index
    %c0_4 = arith.constant 0 : index
    %2 = vector.load %arg3[%c0_3, %c0_4] : memref<192x32xbf16, #tpu.memory_space<vmem>>, vector<192x32xbf16>
    %c0_5 = arith.constant 0 : index
    %c0_6 = arith.constant 0 : index
    %3 = vector.load %arg2[%c0_5, %c0_6] : memref<16x32xf32, #tpu.memory_space<vmem>>, vector<16x32xf32>
    %4 = arith.truncf %1 : vector<16x192xf32> to vector<16x192xbf16>
    %cst = arith.constant dense<0.000000e+00> : vector<16x32xf32>
    %5 = tpu.matmul %4, %2, %cst {dimension_numbers = #tpu.dot_dimension_numbers<[1], [0], [0], [1], [0, 0, 1, 1], [], []>} : vector<16x192xbf16>, vector<192x32xbf16>, vector<16x32xf32> -> vector<16x32xf32>
    %6 = arith.addf %5, %3 : vector<16x32xf32>
    %c0_7 = arith.constant 0 : index
    %c0_8 = arith.constant 0 : index
    %c0_9 = arith.constant 0 : index
    %7 = vector.load %arg4[%c0_7, %c0_8, %c0_9] : memref<2x1x32xf32, #tpu.memory_space<vmem>>, vector<1x1x32xf32>
    %8 = vector.shape_cast %7 : vector<1x1x32xf32> to vector<1x32xf32>
    %c0_10 = arith.constant 0 : index
    %c0_11 = arith.constant 0 : index
    %c0_12 = arith.constant 0 : index
    %9 = vector.load %arg5[%c0_10, %c0_11, %c0_12] : memref<2x1x32xf32, #tpu.memory_space<vmem>>, vector<1x1x32xf32>
    %10 = vector.shape_cast %9 : vector<1x1x32xf32> to vector<1x32xf32>
    %cst_13 = arith.constant dense<0.000000e+00> : vector<16xf32>
    %11 = vector.multi_reduction <add>, %6, %cst_13 [1] : vector<16x32xf32> to vector<16xf32>
    %12 = vector.shape_cast %11 : vector<16xf32> to vector<16x1xf32>
    %cst_14 = arith.constant 3.200000e+01 : f32
    %13 = vector.broadcast %cst_14 : f32 to vector<16x1xf32>
    %14 = arith.divf %12, %13 : vector<16x1xf32>
    %15 = vector.broadcast %14 : vector<16x1xf32> to vector<16x32xf32>
    %16 = arith.subf %6, %15 : vector<16x32xf32>
    %17 = arith.mulf %16, %16 : vector<16x32xf32>
    %cst_15 = arith.constant dense<0.000000e+00> : vector<16xf32>
    %18 = vector.multi_reduction <add>, %17, %cst_15 [1] : vector<16x32xf32> to vector<16xf32>
    %19 = vector.shape_cast %18 : vector<16xf32> to vector<16x1xf32>
    %cst_16 = arith.constant 3.200000e+01 : f32
    %20 = vector.broadcast %cst_16 : f32 to vector<16x1xf32>
    %21 = arith.divf %19, %20 : vector<16x1xf32>
    %22 = vector.broadcast %14 : vector<16x1xf32> to vector<16x32xf32>
    %23 = arith.subf %6, %22 : vector<16x32xf32>
    %cst_17 = arith.constant 9.99999997E-7 : f32
    %24 = vector.broadcast %cst_17 : f32 to vector<16x1xf32>
    %25 = arith.addf %21, %24 : vector<16x1xf32>
    %26 = math.rsqrt %25 : vector<16x1xf32>
    %27 = vector.broadcast %26 : vector<16x1xf32> to vector<16x32xf32>
    %28 = arith.mulf %23, %27 : vector<16x32xf32>
    %29 = vector.broadcast %8 : vector<1x32xf32> to vector<16x32xf32>
    %30 = arith.mulf %28, %29 : vector<16x32xf32>
    %31 = vector.broadcast %10 : vector<1x32xf32> to vector<16x32xf32>
    %32 = arith.addf %30, %31 : vector<16x32xf32>
    %c0_18 = arith.constant 0 : index
    %c0_19 = arith.constant 0 : index
    %c0_20 = arith.constant 0 : index
    %33 = vector.load %arg6[%c0_18, %c0_19, %c0_20] : memref<2x32x96xbf16, #tpu.memory_space<vmem>>, vector<1x32x96xbf16>
    %34 = vector.shape_cast %33 : vector<1x32x96xbf16> to vector<32x96xbf16>
    %c0_21 = arith.constant 0 : index
    %c0_22 = arith.constant 0 : index
    %c0_23 = arith.constant 0 : index
    %35 = vector.load %arg7[%c0_21, %c0_22, %c0_23] : memref<2x1x96xf32, #tpu.memory_space<vmem>>, vector<1x1x96xf32>
    %36 = vector.shape_cast %35 : vector<1x1x96xf32> to vector<1x96xf32>
    %37 = arith.truncf %32 : vector<16x32xf32> to vector<16x32xbf16>
    %cst_24 = arith.constant dense<0.000000e+00> : vector<16x96xf32>
    %38 = tpu.matmul %37, %34, %cst_24 {dimension_numbers = #tpu.dot_dimension_numbers<[1], [0], [0], [1], [0, 0, 1, 1], [], []>} : vector<16x32xbf16>, vector<32x96xbf16>, vector<16x96xf32> -> vector<16x96xf32>
    %39 = vector.broadcast %36 : vector<1x96xf32> to vector<16x96xf32>
    %40 = arith.addf %38, %39 : vector<16x96xf32>
    %41 = arith.truncf %40 : vector<16x96xf32> to vector<16x96xbf16>
    %42 = vector.extract_strided_slice %41 {offsets = [0, 0], sizes = [16, 8], strides = [1, 1]} : vector<16x96xbf16> to vector<16x8xbf16>
    %43 = vector.extract_strided_slice %41 {offsets = [0, 32], sizes = [16, 8], strides = [1, 1]} : vector<16x96xbf16> to vector<16x8xbf16>
    %44 = vector.extract_strided_slice %41 {offsets = [0, 64], sizes = [16, 8], strides = [1, 1]} : vector<16x96xbf16> to vector<16x8xbf16>
    %cst_25 = arith.constant dense<0.000000e+00> : vector<16x16xf32>
    %45 = tpu.matmul %42, %43, %cst_25 {dimension_numbers = #tpu.dot_dimension_numbers<[1], [1], [0], [0], [0, 0, 1, 0], [], []>} : vector<16x8xbf16>, vector<16x8xbf16>, vector<16x16xf32> -> vector<16x16xf32>
    %46 = arith.addf %45, %0 : vector<16x16xf32>
    %cst_26 = arith.constant dense<0xFF800000> : vector<16xf32>
    %47 = vector.multi_reduction <maximumf>, %46, %cst_26 [1] : vector<16x16xf32> to vector<16xf32>
    %48 = vector.shape_cast %47 : vector<16xf32> to vector<16x1xf32>
    %49 = vector.broadcast %48 : vector<16x1xf32> to vector<16x16xf32>
    %50 = arith.subf %46, %49 : vector<16x16xf32>
    %51 = math.exp %50 : vector<16x16xf32>
    %cst_27 = arith.constant dense<0.000000e+00> : vector<16xf32>
    %52 = vector.multi_reduction <add>, %51, %cst_27 [1] : vector<16x16xf32> to vector<16xf32>
    %53 = vector.shape_cast %52 : vector<16xf32> to vector<16x1xf32>
    %54 = tpu.reciprocal %53 {approx = true} : vector<16x1xf32> -> vector<16x1xf32>
    %55 = vector.broadcast %54 : vector<16x1xf32> to vector<16x16xf32>
    %56 = arith.mulf %51, %55 : vector<16x16xf32>
    %57 = arith.truncf %56 : vector<16x16xf32> to vector<16x16xbf16>
    %cst_28 = arith.constant dense<0.000000e+00> : vector<16x8xf32>
    %58 = tpu.matmul %57, %44, %cst_28 {dimension_numbers = #tpu.dot_dimension_numbers<[1], [0], [0], [1], [0, 0, 1, 1], [], []>} : vector<16x16xbf16>, vector<16x8xbf16>, vector<16x8xf32> -> vector<16x8xf32>
    %59 = vector.extract_strided_slice %41 {offsets = [0, 8], sizes = [16, 8], strides = [1, 1]} : vector<16x96xbf16> to vector<16x8xbf16>
    %60 = vector.extract_strided_slice %41 {offsets = [0, 40], sizes = [16, 8], strides = [1, 1]} : vector<16x96xbf16> to vector<16x8xbf16>
    %61 = vector.extract_strided_slice %41 {offsets = [0, 72], sizes = [16, 8], strides = [1, 1]} : vector<16x96xbf16> to vector<16x8xbf16>
    %cst_29 = arith.constant dense<0.000000e+00> : vector<16x16xf32>
    %62 = tpu.matmul %59, %60, %cst_29 {dimension_numbers = #tpu.dot_dimension_numbers<[1], [1], [0], [0], [0, 0, 1, 0], [], []>} : vector<16x8xbf16>, vector<16x8xbf16>, vector<16x16xf32> -> vector<16x16xf32>
    %63 = arith.addf %62, %0 : vector<16x16xf32>
    %cst_30 = arith.constant dense<0xFF800000> : vector<16xf32>
    %64 = vector.multi_reduction <maximumf>, %63, %cst_30 [1] : vector<16x16xf32> to vector<16xf32>
    %65 = vector.shape_cast %64 : vector<16xf32> to vector<16x1xf32>
    %66 = vector.broadcast %65 : vector<16x1xf32> to vector<16x16xf32>
    %67 = arith.subf %63, %66 : vector<16x16xf32>
    %68 = math.exp %67 : vector<16x16xf32>
    %cst_31 = arith.constant dense<0.000000e+00> : vector<16xf32>
    %69 = vector.multi_reduction <add>, %68, %cst_31 [1] : vector<16x16xf32> to vector<16xf32>
    %70 = vector.shape_cast %69 : vector<16xf32> to vector<16x1xf32>
    %71 = tpu.reciprocal %70 {approx = true} : vector<16x1xf32> -> vector<16x1xf32>
    %72 = vector.broadcast %71 : vector<16x1xf32> to vector<16x16xf32>
    %73 = arith.mulf %68, %72 : vector<16x16xf32>
    %74 = arith.truncf %73 : vector<16x16xf32> to vector<16x16xbf16>
    %cst_32 = arith.constant dense<0.000000e+00> : vector<16x8xf32>
    %75 = tpu.matmul %74, %61, %cst_32 {dimension_numbers = #tpu.dot_dimension_numbers<[1], [0], [0], [1], [0, 0, 1, 1], [], []>} : vector<16x16xbf16>, vector<16x8xbf16>, vector<16x8xf32> -> vector<16x8xf32>
    %76 = vector.extract_strided_slice %41 {offsets = [0, 16], sizes = [16, 8], strides = [1, 1]} : vector<16x96xbf16> to vector<16x8xbf16>
    %77 = vector.extract_strided_slice %41 {offsets = [0, 48], sizes = [16, 8], strides = [1, 1]} : vector<16x96xbf16> to vector<16x8xbf16>
    %78 = vector.extract_strided_slice %41 {offsets = [0, 80], sizes = [16, 8], strides = [1, 1]} : vector<16x96xbf16> to vector<16x8xbf16>
    %cst_33 = arith.constant dense<0.000000e+00> : vector<16x16xf32>
    %79 = tpu.matmul %76, %77, %cst_33 {dimension_numbers = #tpu.dot_dimension_numbers<[1], [1], [0], [0], [0, 0, 1, 0], [], []>} : vector<16x8xbf16>, vector<16x8xbf16>, vector<16x16xf32> -> vector<16x16xf32>
    %80 = arith.addf %79, %0 : vector<16x16xf32>
    %cst_34 = arith.constant dense<0xFF800000> : vector<16xf32>
    %81 = vector.multi_reduction <maximumf>, %80, %cst_34 [1] : vector<16x16xf32> to vector<16xf32>
    %82 = vector.shape_cast %81 : vector<16xf32> to vector<16x1xf32>
    %83 = vector.broadcast %82 : vector<16x1xf32> to vector<16x16xf32>
    %84 = arith.subf %80, %83 : vector<16x16xf32>
    %85 = math.exp %84 : vector<16x16xf32>
    %cst_35 = arith.constant dense<0.000000e+00> : vector<16xf32>
    %86 = vector.multi_reduction <add>, %85, %cst_35 [1] : vector<16x16xf32> to vector<16xf32>
    %87 = vector.shape_cast %86 : vector<16xf32> to vector<16x1xf32>
    %88 = tpu.reciprocal %87 {approx = true} : vector<16x1xf32> -> vector<16x1xf32>
    %89 = vector.broadcast %88 : vector<16x1xf32> to vector<16x16xf32>
    %90 = arith.mulf %85, %89 : vector<16x16xf32>
    %91 = arith.truncf %90 : vector<16x16xf32> to vector<16x16xbf16>
    %cst_36 = arith.constant dense<0.000000e+00> : vector<16x8xf32>
    %92 = tpu.matmul %91, %78, %cst_36 {dimension_numbers = #tpu.dot_dimension_numbers<[1], [0], [0], [1], [0, 0, 1, 1], [], []>} : vector<16x16xbf16>, vector<16x8xbf16>, vector<16x8xf32> -> vector<16x8xf32>
    %93 = vector.extract_strided_slice %41 {offsets = [0, 24], sizes = [16, 8], strides = [1, 1]} : vector<16x96xbf16> to vector<16x8xbf16>
    %94 = vector.extract_strided_slice %41 {offsets = [0, 56], sizes = [16, 8], strides = [1, 1]} : vector<16x96xbf16> to vector<16x8xbf16>
    %95 = vector.extract_strided_slice %41 {offsets = [0, 88], sizes = [16, 8], strides = [1, 1]} : vector<16x96xbf16> to vector<16x8xbf16>
    %cst_37 = arith.constant dense<0.000000e+00> : vector<16x16xf32>
    %96 = tpu.matmul %93, %94, %cst_37 {dimension_numbers = #tpu.dot_dimension_numbers<[1], [1], [0], [0], [0, 0, 1, 0], [], []>} : vector<16x8xbf16>, vector<16x8xbf16>, vector<16x16xf32> -> vector<16x16xf32>
    %97 = arith.addf %96, %0 : vector<16x16xf32>
    %cst_38 = arith.constant dense<0xFF800000> : vector<16xf32>
    %98 = vector.multi_reduction <maximumf>, %97, %cst_38 [1] : vector<16x16xf32> to vector<16xf32>
    %99 = vector.shape_cast %98 : vector<16xf32> to vector<16x1xf32>
    %100 = vector.broadcast %99 : vector<16x1xf32> to vector<16x16xf32>
    %101 = arith.subf %97, %100 : vector<16x16xf32>
    %102 = math.exp %101 : vector<16x16xf32>
    %cst_39 = arith.constant dense<0.000000e+00> : vector<16xf32>
    %103 = vector.multi_reduction <add>, %102, %cst_39 [1] : vector<16x16xf32> to vector<16xf32>
    %104 = vector.shape_cast %103 : vector<16xf32> to vector<16x1xf32>
    %105 = tpu.reciprocal %104 {approx = true} : vector<16x1xf32> -> vector<16x1xf32>
    %106 = vector.broadcast %105 : vector<16x1xf32> to vector<16x16xf32>
    %107 = arith.mulf %102, %106 : vector<16x16xf32>
    %108 = arith.truncf %107 : vector<16x16xf32> to vector<16x16xbf16>
    %cst_40 = arith.constant dense<0.000000e+00> : vector<16x8xf32>
    %109 = tpu.matmul %108, %95, %cst_40 {dimension_numbers = #tpu.dot_dimension_numbers<[1], [0], [0], [1], [0, 0, 1, 1], [], []>} : vector<16x16xbf16>, vector<16x8xbf16>, vector<16x8xf32> -> vector<16x8xf32>
    %110 = tpu.concatenate %58, %75, %92, %109 in 1 : vector<16x8xf32>, vector<16x8xf32>, vector<16x8xf32>, vector<16x8xf32> -> vector<16x32xf32>
    %c0_41 = arith.constant 0 : index
    %c0_42 = arith.constant 0 : index
    %c0_43 = arith.constant 0 : index
    %111 = vector.load %arg8[%c0_41, %c0_42, %c0_43] : memref<2x32x32xbf16, #tpu.memory_space<vmem>>, vector<1x32x32xbf16>
    %112 = vector.shape_cast %111 : vector<1x32x32xbf16> to vector<32x32xbf16>
    %c0_44 = arith.constant 0 : index
    %c0_45 = arith.constant 0 : index
    %c0_46 = arith.constant 0 : index
    %113 = vector.load %arg9[%c0_44, %c0_45, %c0_46] : memref<2x1x32xf32, #tpu.memory_space<vmem>>, vector<1x1x32xf32>
    %114 = vector.shape_cast %113 : vector<1x1x32xf32> to vector<1x32xf32>
    %115 = arith.truncf %110 : vector<16x32xf32> to vector<16x32xbf16>
    %cst_47 = arith.constant dense<0.000000e+00> : vector<16x32xf32>
    %116 = tpu.matmul %115, %112, %cst_47 {dimension_numbers = #tpu.dot_dimension_numbers<[1], [0], [0], [1], [0, 0, 1, 1], [], []>} : vector<16x32xbf16>, vector<32x32xbf16>, vector<16x32xf32> -> vector<16x32xf32>
    %117 = vector.broadcast %114 : vector<1x32xf32> to vector<16x32xf32>
    %118 = arith.addf %116, %117 : vector<16x32xf32>
    %119 = arith.addf %6, %118 : vector<16x32xf32>
    %c0_48 = arith.constant 0 : index
    %c0_49 = arith.constant 0 : index
    %c0_50 = arith.constant 0 : index
    %120 = vector.load %arg10[%c0_48, %c0_49, %c0_50] : memref<2x1x32xf32, #tpu.memory_space<vmem>>, vector<1x1x32xf32>
    %121 = vector.shape_cast %120 : vector<1x1x32xf32> to vector<1x32xf32>
    %c0_51 = arith.constant 0 : index
    %c0_52 = arith.constant 0 : index
    %c0_53 = arith.constant 0 : index
    %122 = vector.load %arg11[%c0_51, %c0_52, %c0_53] : memref<2x1x32xf32, #tpu.memory_space<vmem>>, vector<1x1x32xf32>
    %123 = vector.shape_cast %122 : vector<1x1x32xf32> to vector<1x32xf32>
    %cst_54 = arith.constant dense<0.000000e+00> : vector<16xf32>
    %124 = vector.multi_reduction <add>, %119, %cst_54 [1] : vector<16x32xf32> to vector<16xf32>
    %125 = vector.shape_cast %124 : vector<16xf32> to vector<16x1xf32>
    %cst_55 = arith.constant 3.200000e+01 : f32
    %126 = vector.broadcast %cst_55 : f32 to vector<16x1xf32>
    %127 = arith.divf %125, %126 : vector<16x1xf32>
    %128 = vector.broadcast %127 : vector<16x1xf32> to vector<16x32xf32>
    %129 = arith.subf %119, %128 : vector<16x32xf32>
    %130 = arith.mulf %129, %129 : vector<16x32xf32>
    %cst_56 = arith.constant dense<0.000000e+00> : vector<16xf32>
    %131 = vector.multi_reduction <add>, %130, %cst_56 [1] : vector<16x32xf32> to vector<16xf32>
    %132 = vector.shape_cast %131 : vector<16xf32> to vector<16x1xf32>
    %cst_57 = arith.constant 3.200000e+01 : f32
    %133 = vector.broadcast %cst_57 : f32 to vector<16x1xf32>
    %134 = arith.divf %132, %133 : vector<16x1xf32>
    %135 = vector.broadcast %127 : vector<16x1xf32> to vector<16x32xf32>
    %136 = arith.subf %119, %135 : vector<16x32xf32>
    %cst_58 = arith.constant 9.99999997E-7 : f32
    %137 = vector.broadcast %cst_58 : f32 to vector<16x1xf32>
    %138 = arith.addf %134, %137 : vector<16x1xf32>
    %139 = math.rsqrt %138 : vector<16x1xf32>
    %140 = vector.broadcast %139 : vector<16x1xf32> to vector<16x32xf32>
    %141 = arith.mulf %136, %140 : vector<16x32xf32>
    %142 = vector.broadcast %121 : vector<1x32xf32> to vector<16x32xf32>
    %143 = arith.mulf %141, %142 : vector<16x32xf32>
    %144 = vector.broadcast %123 : vector<1x32xf32> to vector<16x32xf32>
    %145 = arith.addf %143, %144 : vector<16x32xf32>
    %c0_59 = arith.constant 0 : index
    %c0_60 = arith.constant 0 : index
    %c0_61 = arith.constant 0 : index
    %146 = vector.load %arg12[%c0_59, %c0_60, %c0_61] : memref<2x32x128xbf16, #tpu.memory_space<vmem>>, vector<1x32x128xbf16>
    %147 = vector.shape_cast %146 : vector<1x32x128xbf16> to vector<32x128xbf16>
    %c0_62 = arith.constant 0 : index
    %c0_63 = arith.constant 0 : index
    %c0_64 = arith.constant 0 : index
    %148 = vector.load %arg13[%c0_62, %c0_63, %c0_64] : memref<2x1x128xf32, #tpu.memory_space<vmem>>, vector<1x1x128xf32>
    %149 = vector.shape_cast %148 : vector<1x1x128xf32> to vector<1x128xf32>
    %150 = arith.truncf %145 : vector<16x32xf32> to vector<16x32xbf16>
    %cst_65 = arith.constant dense<0.000000e+00> : vector<16x128xf32>
    %151 = tpu.matmul %150, %147, %cst_65 {dimension_numbers = #tpu.dot_dimension_numbers<[1], [0], [0], [1], [0, 0, 1, 1], [], []>} : vector<16x32xbf16>, vector<32x128xbf16>, vector<16x128xf32> -> vector<16x128xf32>
    %152 = vector.broadcast %149 : vector<1x128xf32> to vector<16x128xf32>
    %153 = arith.addf %151, %152 : vector<16x128xf32>
    %154 = arith.mulf %153, %153 : vector<16x128xf32>
    %cst_66 = arith.constant 0.797884583 : f32
    %155 = vector.broadcast %cst_66 : f32 to vector<16x128xf32>
    %156 = arith.mulf %155, %153 : vector<16x128xf32>
    %cst_67 = arith.constant 4.471500e-02 : f32
    %157 = vector.broadcast %cst_67 : f32 to vector<16x128xf32>
    %158 = arith.mulf %157, %154 : vector<16x128xf32>
    %cst_68 = arith.constant 1.000000e+00 : f32
    %159 = vector.broadcast %cst_68 : f32 to vector<16x128xf32>
    %160 = arith.addf %159, %158 : vector<16x128xf32>
    %161 = arith.mulf %156, %160 : vector<16x128xf32>
    %162 = math.tanh %161 : vector<16x128xf32>
    %cst_69 = arith.constant 5.000000e-01 : f32
    %163 = vector.broadcast %cst_69 : f32 to vector<16x128xf32>
    %164 = arith.mulf %163, %162 : vector<16x128xf32>
    %cst_70 = arith.constant 5.000000e-01 : f32
    %165 = vector.broadcast %cst_70 : f32 to vector<16x128xf32>
    %166 = arith.addf %165, %164 : vector<16x128xf32>
    %167 = arith.mulf %153, %166 : vector<16x128xf32>
    %c0_71 = arith.constant 0 : index
    %c0_72 = arith.constant 0 : index
    %c0_73 = arith.constant 0 : index
    %168 = vector.load %arg14[%c0_71, %c0_72, %c0_73] : memref<2x128x32xbf16, #tpu.memory_space<vmem>>, vector<1x128x32xbf16>
    %169 = vector.shape_cast %168 : vector<1x128x32xbf16> to vector<128x32xbf16>
    %c0_74 = arith.constant 0 : index
    %c0_75 = arith.constant 0 : index
    %c0_76 = arith.constant 0 : index
    %170 = vector.load %arg15[%c0_74, %c0_75, %c0_76] : memref<2x1x32xf32, #tpu.memory_space<vmem>>, vector<1x1x32xf32>
    %171 = vector.shape_cast %170 : vector<1x1x32xf32> to vector<1x32xf32>
    %172 = arith.truncf %167 : vector<16x128xf32> to vector<16x128xbf16>
    %cst_77 = arith.constant dense<0.000000e+00> : vector<16x32xf32>
    %173 = tpu.matmul %172, %169, %cst_77 {dimension_numbers = #tpu.dot_dimension_numbers<[1], [0], [0], [1], [0, 0, 1, 1], [], []>} : vector<16x128xbf16>, vector<128x32xbf16>, vector<16x32xf32> -> vector<16x32xf32>
    %174 = vector.broadcast %171 : vector<1x32xf32> to vector<16x32xf32>
    %175 = arith.addf %173, %174 : vector<16x32xf32>
    %176 = arith.addf %119, %175 : vector<16x32xf32>
    %c1 = arith.constant 1 : index
    %c0_78 = arith.constant 0 : index
    %c0_79 = arith.constant 0 : index
    %177 = vector.load %arg4[%c1, %c0_78, %c0_79] : memref<2x1x32xf32, #tpu.memory_space<vmem>>, vector<1x1x32xf32>
    %178 = vector.shape_cast %177 : vector<1x1x32xf32> to vector<1x32xf32>
    %c1_80 = arith.constant 1 : index
    %c0_81 = arith.constant 0 : index
    %c0_82 = arith.constant 0 : index
    %179 = vector.load %arg5[%c1_80, %c0_81, %c0_82] : memref<2x1x32xf32, #tpu.memory_space<vmem>>, vector<1x1x32xf32>
    %180 = vector.shape_cast %179 : vector<1x1x32xf32> to vector<1x32xf32>
    %cst_83 = arith.constant dense<0.000000e+00> : vector<16xf32>
    %181 = vector.multi_reduction <add>, %176, %cst_83 [1] : vector<16x32xf32> to vector<16xf32>
    %182 = vector.shape_cast %181 : vector<16xf32> to vector<16x1xf32>
    %cst_84 = arith.constant 3.200000e+01 : f32
    %183 = vector.broadcast %cst_84 : f32 to vector<16x1xf32>
    %184 = arith.divf %182, %183 : vector<16x1xf32>
    %185 = vector.broadcast %184 : vector<16x1xf32> to vector<16x32xf32>
    %186 = arith.subf %176, %185 : vector<16x32xf32>
    %187 = arith.mulf %186, %186 : vector<16x32xf32>
    %cst_85 = arith.constant dense<0.000000e+00> : vector<16xf32>
    %188 = vector.multi_reduction <add>, %187, %cst_85 [1] : vector<16x32xf32> to vector<16xf32>
    %189 = vector.shape_cast %188 : vector<16xf32> to vector<16x1xf32>
    %cst_86 = arith.constant 3.200000e+01 : f32
    %190 = vector.broadcast %cst_86 : f32 to vector<16x1xf32>
    %191 = arith.divf %189, %190 : vector<16x1xf32>
    %192 = vector.broadcast %184 : vector<16x1xf32> to vector<16x32xf32>
    %193 = arith.subf %176, %192 : vector<16x32xf32>
    %cst_87 = arith.constant 9.99999997E-7 : f32
    %194 = vector.broadcast %cst_87 : f32 to vector<16x1xf32>
    %195 = arith.addf %191, %194 : vector<16x1xf32>
    %196 = math.rsqrt %195 : vector<16x1xf32>
    %197 = vector.broadcast %196 : vector<16x1xf32> to vector<16x32xf32>
    %198 = arith.mulf %193, %197 : vector<16x32xf32>
    %199 = vector.broadcast %178 : vector<1x32xf32> to vector<16x32xf32>
    %200 = arith.mulf %198, %199 : vector<16x32xf32>
    %201 = vector.broadcast %180 : vector<1x32xf32> to vector<16x32xf32>
    %202 = arith.addf %200, %201 : vector<16x32xf32>
    %c1_88 = arith.constant 1 : index
    %c0_89 = arith.constant 0 : index
    %c0_90 = arith.constant 0 : index
    %203 = vector.load %arg6[%c1_88, %c0_89, %c0_90] : memref<2x32x96xbf16, #tpu.memory_space<vmem>>, vector<1x32x96xbf16>
    %204 = vector.shape_cast %203 : vector<1x32x96xbf16> to vector<32x96xbf16>
    %c1_91 = arith.constant 1 : index
    %c0_92 = arith.constant 0 : index
    %c0_93 = arith.constant 0 : index
    %205 = vector.load %arg7[%c1_91, %c0_92, %c0_93] : memref<2x1x96xf32, #tpu.memory_space<vmem>>, vector<1x1x96xf32>
    %206 = vector.shape_cast %205 : vector<1x1x96xf32> to vector<1x96xf32>
    %207 = arith.truncf %202 : vector<16x32xf32> to vector<16x32xbf16>
    %cst_94 = arith.constant dense<0.000000e+00> : vector<16x96xf32>
    %208 = tpu.matmul %207, %204, %cst_94 {dimension_numbers = #tpu.dot_dimension_numbers<[1], [0], [0], [1], [0, 0, 1, 1], [], []>} : vector<16x32xbf16>, vector<32x96xbf16>, vector<16x96xf32> -> vector<16x96xf32>
    %209 = vector.broadcast %206 : vector<1x96xf32> to vector<16x96xf32>
    %210 = arith.addf %208, %209 : vector<16x96xf32>
    %211 = arith.truncf %210 : vector<16x96xf32> to vector<16x96xbf16>
    %212 = vector.extract_strided_slice %211 {offsets = [0, 0], sizes = [16, 8], strides = [1, 1]} : vector<16x96xbf16> to vector<16x8xbf16>
    %213 = vector.extract_strided_slice %211 {offsets = [0, 32], sizes = [16, 8], strides = [1, 1]} : vector<16x96xbf16> to vector<16x8xbf16>
    %214 = vector.extract_strided_slice %211 {offsets = [0, 64], sizes = [16, 8], strides = [1, 1]} : vector<16x96xbf16> to vector<16x8xbf16>
    %cst_95 = arith.constant dense<0.000000e+00> : vector<16x16xf32>
    %215 = tpu.matmul %212, %213, %cst_95 {dimension_numbers = #tpu.dot_dimension_numbers<[1], [1], [0], [0], [0, 0, 1, 0], [], []>} : vector<16x8xbf16>, vector<16x8xbf16>, vector<16x16xf32> -> vector<16x16xf32>
    %216 = arith.addf %215, %0 : vector<16x16xf32>
    %cst_96 = arith.constant dense<0xFF800000> : vector<16xf32>
    %217 = vector.multi_reduction <maximumf>, %216, %cst_96 [1] : vector<16x16xf32> to vector<16xf32>
    %218 = vector.shape_cast %217 : vector<16xf32> to vector<16x1xf32>
    %219 = vector.broadcast %218 : vector<16x1xf32> to vector<16x16xf32>
    %220 = arith.subf %216, %219 : vector<16x16xf32>
    %221 = math.exp %220 : vector<16x16xf32>
    %cst_97 = arith.constant dense<0.000000e+00> : vector<16xf32>
    %222 = vector.multi_reduction <add>, %221, %cst_97 [1] : vector<16x16xf32> to vector<16xf32>
    %223 = vector.shape_cast %222 : vector<16xf32> to vector<16x1xf32>
    %224 = tpu.reciprocal %223 {approx = true} : vector<16x1xf32> -> vector<16x1xf32>
    %225 = vector.broadcast %224 : vector<16x1xf32> to vector<16x16xf32>
    %226 = arith.mulf %221, %225 : vector<16x16xf32>
    %227 = arith.truncf %226 : vector<16x16xf32> to vector<16x16xbf16>
    %cst_98 = arith.constant dense<0.000000e+00> : vector<16x8xf32>
    %228 = tpu.matmul %227, %214, %cst_98 {dimension_numbers = #tpu.dot_dimension_numbers<[1], [0], [0], [1], [0, 0, 1, 1], [], []>} : vector<16x16xbf16>, vector<16x8xbf16>, vector<16x8xf32> -> vector<16x8xf32>
    %229 = vector.extract_strided_slice %211 {offsets = [0, 8], sizes = [16, 8], strides = [1, 1]} : vector<16x96xbf16> to vector<16x8xbf16>
    %230 = vector.extract_strided_slice %211 {offsets = [0, 40], sizes = [16, 8], strides = [1, 1]} : vector<16x96xbf16> to vector<16x8xbf16>
    %231 = vector.extract_strided_slice %211 {offsets = [0, 72], sizes = [16, 8], strides = [1, 1]} : vector<16x96xbf16> to vector<16x8xbf16>
    %cst_99 = arith.constant dense<0.000000e+00> : vector<16x16xf32>
    %232 = tpu.matmul %229, %230, %cst_99 {dimension_numbers = #tpu.dot_dimension_numbers<[1], [1], [0], [0], [0, 0, 1, 0], [], []>} : vector<16x8xbf16>, vector<16x8xbf16>, vector<16x16xf32> -> vector<16x16xf32>
    %233 = arith.addf %232, %0 : vector<16x16xf32>
    %cst_100 = arith.constant dense<0xFF800000> : vector<16xf32>
    %234 = vector.multi_reduction <maximumf>, %233, %cst_100 [1] : vector<16x16xf32> to vector<16xf32>
    %235 = vector.shape_cast %234 : vector<16xf32> to vector<16x1xf32>
    %236 = vector.broadcast %235 : vector<16x1xf32> to vector<16x16xf32>
    %237 = arith.subf %233, %236 : vector<16x16xf32>
    %238 = math.exp %237 : vector<16x16xf32>
    %cst_101 = arith.constant dense<0.000000e+00> : vector<16xf32>
    %239 = vector.multi_reduction <add>, %238, %cst_101 [1] : vector<16x16xf32> to vector<16xf32>
    %240 = vector.shape_cast %239 : vector<16xf32> to vector<16x1xf32>
    %241 = tpu.reciprocal %240 {approx = true} : vector<16x1xf32> -> vector<16x1xf32>
    %242 = vector.broadcast %241 : vector<16x1xf32> to vector<16x16xf32>
    %243 = arith.mulf %238, %242 : vector<16x16xf32>
    %244 = arith.truncf %243 : vector<16x16xf32> to vector<16x16xbf16>
    %cst_102 = arith.constant dense<0.000000e+00> : vector<16x8xf32>
    %245 = tpu.matmul %244, %231, %cst_102 {dimension_numbers = #tpu.dot_dimension_numbers<[1], [0], [0], [1], [0, 0, 1, 1], [], []>} : vector<16x16xbf16>, vector<16x8xbf16>, vector<16x8xf32> -> vector<16x8xf32>
    %246 = vector.extract_strided_slice %211 {offsets = [0, 16], sizes = [16, 8], strides = [1, 1]} : vector<16x96xbf16> to vector<16x8xbf16>
    %247 = vector.extract_strided_slice %211 {offsets = [0, 48], sizes = [16, 8], strides = [1, 1]} : vector<16x96xbf16> to vector<16x8xbf16>
    %248 = vector.extract_strided_slice %211 {offsets = [0, 80], sizes = [16, 8], strides = [1, 1]} : vector<16x96xbf16> to vector<16x8xbf16>
    %cst_103 = arith.constant dense<0.000000e+00> : vector<16x16xf32>
    %249 = tpu.matmul %246, %247, %cst_103 {dimension_numbers = #tpu.dot_dimension_numbers<[1], [1], [0], [0], [0, 0, 1, 0], [], []>} : vector<16x8xbf16>, vector<16x8xbf16>, vector<16x16xf32> -> vector<16x16xf32>
    %250 = arith.addf %249, %0 : vector<16x16xf32>
    %cst_104 = arith.constant dense<0xFF800000> : vector<16xf32>
    %251 = vector.multi_reduction <maximumf>, %250, %cst_104 [1] : vector<16x16xf32> to vector<16xf32>
    %252 = vector.shape_cast %251 : vector<16xf32> to vector<16x1xf32>
    %253 = vector.broadcast %252 : vector<16x1xf32> to vector<16x16xf32>
    %254 = arith.subf %250, %253 : vector<16x16xf32>
    %255 = math.exp %254 : vector<16x16xf32>
    %cst_105 = arith.constant dense<0.000000e+00> : vector<16xf32>
    %256 = vector.multi_reduction <add>, %255, %cst_105 [1] : vector<16x16xf32> to vector<16xf32>
    %257 = vector.shape_cast %256 : vector<16xf32> to vector<16x1xf32>
    %258 = tpu.reciprocal %257 {approx = true} : vector<16x1xf32> -> vector<16x1xf32>
    %259 = vector.broadcast %258 : vector<16x1xf32> to vector<16x16xf32>
    %260 = arith.mulf %255, %259 : vector<16x16xf32>
    %261 = arith.truncf %260 : vector<16x16xf32> to vector<16x16xbf16>
    %cst_106 = arith.constant dense<0.000000e+00> : vector<16x8xf32>
    %262 = tpu.matmul %261, %248, %cst_106 {dimension_numbers = #tpu.dot_dimension_numbers<[1], [0], [0], [1], [0, 0, 1, 1], [], []>} : vector<16x16xbf16>, vector<16x8xbf16>, vector<16x8xf32> -> vector<16x8xf32>
    %263 = vector.extract_strided_slice %211 {offsets = [0, 24], sizes = [16, 8], strides = [1, 1]} : vector<16x96xbf16> to vector<16x8xbf16>
    %264 = vector.extract_strided_slice %211 {offsets = [0, 56], sizes = [16, 8], strides = [1, 1]} : vector<16x96xbf16> to vector<16x8xbf16>
    %265 = vector.extract_strided_slice %211 {offsets = [0, 88], sizes = [16, 8], strides = [1, 1]} : vector<16x96xbf16> to vector<16x8xbf16>
    %cst_107 = arith.constant dense<0.000000e+00> : vector<16x16xf32>
    %266 = tpu.matmul %263, %264, %cst_107 {dimension_numbers = #tpu.dot_dimension_numbers<[1], [1], [0], [0], [0, 0, 1, 0], [], []>} : vector<16x8xbf16>, vector<16x8xbf16>, vector<16x16xf32> -> vector<16x16xf32>
    %267 = arith.addf %266, %0 : vector<16x16xf32>
    %cst_108 = arith.constant dense<0xFF800000> : vector<16xf32>
    %268 = vector.multi_reduction <maximumf>, %267, %cst_108 [1] : vector<16x16xf32> to vector<16xf32>
    %269 = vector.shape_cast %268 : vector<16xf32> to vector<16x1xf32>
    %270 = vector.broadcast %269 : vector<16x1xf32> to vector<16x16xf32>
    %271 = arith.subf %267, %270 : vector<16x16xf32>
    %272 = math.exp %271 : vector<16x16xf32>
    %cst_109 = arith.constant dense<0.000000e+00> : vector<16xf32>
    %273 = vector.multi_reduction <add>, %272, %cst_109 [1] : vector<16x16xf32> to vector<16xf32>
    %274 = vector.shape_cast %273 : vector<16xf32> to vector<16x1xf32>
    %275 = tpu.reciprocal %274 {approx = true} : vector<16x1xf32> -> vector<16x1xf32>
    %276 = vector.broadcast %275 : vector<16x1xf32> to vector<16x16xf32>
    %277 = arith.mulf %272, %276 : vector<16x16xf32>
    %278 = arith.truncf %277 : vector<16x16xf32> to vector<16x16xbf16>
    %cst_110 = arith.constant dense<0.000000e+00> : vector<16x8xf32>
    %279 = tpu.matmul %278, %265, %cst_110 {dimension_numbers = #tpu.dot_dimension_numbers<[1], [0], [0], [1], [0, 0, 1, 1], [], []>} : vector<16x16xbf16>, vector<16x8xbf16>, vector<16x8xf32> -> vector<16x8xf32>
    %280 = tpu.concatenate %228, %245, %262, %279 in 1 : vector<16x8xf32>, vector<16x8xf32>, vector<16x8xf32>, vector<16x8xf32> -> vector<16x32xf32>
    %c1_111 = arith.constant 1 : index
    %c0_112 = arith.constant 0 : index
    %c0_113 = arith.constant 0 : index
    %281 = vector.load %arg8[%c1_111, %c0_112, %c0_113] : memref<2x32x32xbf16, #tpu.memory_space<vmem>>, vector<1x32x32xbf16>
    %282 = vector.shape_cast %281 : vector<1x32x32xbf16> to vector<32x32xbf16>
    %c1_114 = arith.constant 1 : index
    %c0_115 = arith.constant 0 : index
    %c0_116 = arith.constant 0 : index
    %283 = vector.load %arg9[%c1_114, %c0_115, %c0_116] : memref<2x1x32xf32, #tpu.memory_space<vmem>>, vector<1x1x32xf32>
    %284 = vector.shape_cast %283 : vector<1x1x32xf32> to vector<1x32xf32>
    %285 = arith.truncf %280 : vector<16x32xf32> to vector<16x32xbf16>
    %cst_117 = arith.constant dense<0.000000e+00> : vector<16x32xf32>
    %286 = tpu.matmul %285, %282, %cst_117 {dimension_numbers = #tpu.dot_dimension_numbers<[1], [0], [0], [1], [0, 0, 1, 1], [], []>} : vector<16x32xbf16>, vector<32x32xbf16>, vector<16x32xf32> -> vector<16x32xf32>
    %287 = vector.broadcast %284 : vector<1x32xf32> to vector<16x32xf32>
    %288 = arith.addf %286, %287 : vector<16x32xf32>
    %289 = arith.addf %176, %288 : vector<16x32xf32>
    %c1_118 = arith.constant 1 : index
    %c0_119 = arith.constant 0 : index
    %c0_120 = arith.constant 0 : index
    %290 = vector.load %arg10[%c1_118, %c0_119, %c0_120] : memref<2x1x32xf32, #tpu.memory_space<vmem>>, vector<1x1x32xf32>
    %291 = vector.shape_cast %290 : vector<1x1x32xf32> to vector<1x32xf32>
    %c1_121 = arith.constant 1 : index
    %c0_122 = arith.constant 0 : index
    %c0_123 = arith.constant 0 : index
    %292 = vector.load %arg11[%c1_121, %c0_122, %c0_123] : memref<2x1x32xf32, #tpu.memory_space<vmem>>, vector<1x1x32xf32>
    %293 = vector.shape_cast %292 : vector<1x1x32xf32> to vector<1x32xf32>
    %cst_124 = arith.constant dense<0.000000e+00> : vector<16xf32>
    %294 = vector.multi_reduction <add>, %289, %cst_124 [1] : vector<16x32xf32> to vector<16xf32>
    %295 = vector.shape_cast %294 : vector<16xf32> to vector<16x1xf32>
    %cst_125 = arith.constant 3.200000e+01 : f32
    %296 = vector.broadcast %cst_125 : f32 to vector<16x1xf32>
    %297 = arith.divf %295, %296 : vector<16x1xf32>
    %298 = vector.broadcast %297 : vector<16x1xf32> to vector<16x32xf32>
    %299 = arith.subf %289, %298 : vector<16x32xf32>
    %300 = arith.mulf %299, %299 : vector<16x32xf32>
    %cst_126 = arith.constant dense<0.000000e+00> : vector<16xf32>
    %301 = vector.multi_reduction <add>, %300, %cst_126 [1] : vector<16x32xf32> to vector<16xf32>
    %302 = vector.shape_cast %301 : vector<16xf32> to vector<16x1xf32>
    %cst_127 = arith.constant 3.200000e+01 : f32
    %303 = vector.broadcast %cst_127 : f32 to vector<16x1xf32>
    %304 = arith.divf %302, %303 : vector<16x1xf32>
    %305 = vector.broadcast %297 : vector<16x1xf32> to vector<16x32xf32>
    %306 = arith.subf %289, %305 : vector<16x32xf32>
    %cst_128 = arith.constant 9.99999997E-7 : f32
    %307 = vector.broadcast %cst_128 : f32 to vector<16x1xf32>
    %308 = arith.addf %304, %307 : vector<16x1xf32>
    %309 = math.rsqrt %308 : vector<16x1xf32>
    %310 = vector.broadcast %309 : vector<16x1xf32> to vector<16x32xf32>
    %311 = arith.mulf %306, %310 : vector<16x32xf32>
    %312 = vector.broadcast %291 : vector<1x32xf32> to vector<16x32xf32>
    %313 = arith.mulf %311, %312 : vector<16x32xf32>
    %314 = vector.broadcast %293 : vector<1x32xf32> to vector<16x32xf32>
    %315 = arith.addf %313, %314 : vector<16x32xf32>
    %c1_129 = arith.constant 1 : index
    %c0_130 = arith.constant 0 : index
    %c0_131 = arith.constant 0 : index
    %316 = vector.load %arg12[%c1_129, %c0_130, %c0_131] : memref<2x32x128xbf16, #tpu.memory_space<vmem>>, vector<1x32x128xbf16>
    %317 = vector.shape_cast %316 : vector<1x32x128xbf16> to vector<32x128xbf16>
    %c1_132 = arith.constant 1 : index
    %c0_133 = arith.constant 0 : index
    %c0_134 = arith.constant 0 : index
    %318 = vector.load %arg13[%c1_132, %c0_133, %c0_134] : memref<2x1x128xf32, #tpu.memory_space<vmem>>, vector<1x1x128xf32>
    %319 = vector.shape_cast %318 : vector<1x1x128xf32> to vector<1x128xf32>
    %320 = arith.truncf %315 : vector<16x32xf32> to vector<16x32xbf16>
    %cst_135 = arith.constant dense<0.000000e+00> : vector<16x128xf32>
    %321 = tpu.matmul %320, %317, %cst_135 {dimension_numbers = #tpu.dot_dimension_numbers<[1], [0], [0], [1], [0, 0, 1, 1], [], []>} : vector<16x32xbf16>, vector<32x128xbf16>, vector<16x128xf32> -> vector<16x128xf32>
    %322 = vector.broadcast %319 : vector<1x128xf32> to vector<16x128xf32>
    %323 = arith.addf %321, %322 : vector<16x128xf32>
    %324 = arith.mulf %323, %323 : vector<16x128xf32>
    %cst_136 = arith.constant 0.797884583 : f32
    %325 = vector.broadcast %cst_136 : f32 to vector<16x128xf32>
    %326 = arith.mulf %325, %323 : vector<16x128xf32>
    %cst_137 = arith.constant 4.471500e-02 : f32
    %327 = vector.broadcast %cst_137 : f32 to vector<16x128xf32>
    %328 = arith.mulf %327, %324 : vector<16x128xf32>
    %cst_138 = arith.constant 1.000000e+00 : f32
    %329 = vector.broadcast %cst_138 : f32 to vector<16x128xf32>
    %330 = arith.addf %329, %328 : vector<16x128xf32>
    %331 = arith.mulf %326, %330 : vector<16x128xf32>
    %332 = math.tanh %331 : vector<16x128xf32>
    %cst_139 = arith.constant 5.000000e-01 : f32
    %333 = vector.broadcast %cst_139 : f32 to vector<16x128xf32>
    %334 = arith.mulf %333, %332 : vector<16x128xf32>
    %cst_140 = arith.constant 5.000000e-01 : f32
    %335 = vector.broadcast %cst_140 : f32 to vector<16x128xf32>
    %336 = arith.addf %335, %334 : vector<16x128xf32>
    %337 = arith.mulf %323, %336 : vector<16x128xf32>
    %c1_141 = arith.constant 1 : index
    %c0_142 = arith.constant 0 : index
    %c0_143 = arith.constant 0 : index
    %338 = vector.load %arg14[%c1_141, %c0_142, %c0_143] : memref<2x128x32xbf16, #tpu.memory_space<vmem>>, vector<1x128x32xbf16>
    %339 = vector.shape_cast %338 : vector<1x128x32xbf16> to vector<128x32xbf16>
    %c1_144 = arith.constant 1 : index
    %c0_145 = arith.constant 0 : index
    %c0_146 = arith.constant 0 : index
    %340 = vector.load %arg15[%c1_144, %c0_145, %c0_146] : memref<2x1x32xf32, #tpu.memory_space<vmem>>, vector<1x1x32xf32>
    %341 = vector.shape_cast %340 : vector<1x1x32xf32> to vector<1x32xf32>
    %342 = arith.truncf %337 : vector<16x128xf32> to vector<16x128xbf16>
    %cst_147 = arith.constant dense<0.000000e+00> : vector<16x32xf32>
    %343 = tpu.matmul %342, %339, %cst_147 {dimension_numbers = #tpu.dot_dimension_numbers<[1], [0], [0], [1], [0, 0, 1, 1], [], []>} : vector<16x128xbf16>, vector<128x32xbf16>, vector<16x32xf32> -> vector<16x32xf32>
    %344 = vector.broadcast %341 : vector<1x32xf32> to vector<16x32xf32>
    %345 = arith.addf %343, %344 : vector<16x32xf32>
    %346 = arith.addf %289, %345 : vector<16x32xf32>
    %347 = vector.extract_strided_slice %346 {offsets = [0, 0], sizes = [1, 32], strides = [1, 1]} : vector<16x32xf32> to vector<1x32xf32>
    %348 = vector.extract_strided_slice %346 {offsets = [8, 0], sizes = [1, 32], strides = [1, 1]} : vector<16x32xf32> to vector<1x32xf32>
    %349 = tpu.concatenate %347, %348 in 0 : vector<1x32xf32>, vector<1x32xf32> -> vector<2x32xf32>
    %c0_148 = arith.constant 0 : index
    %c0_149 = arith.constant 0 : index
    %350 = vector.load %arg16[%c0_148, %c0_149] : memref<1x32xf32, #tpu.memory_space<vmem>>, vector<1x32xf32>
    %c0_150 = arith.constant 0 : index
    %c0_151 = arith.constant 0 : index
    %351 = vector.load %arg17[%c0_150, %c0_151] : memref<1x32xf32, #tpu.memory_space<vmem>>, vector<1x32xf32>
    %cst_152 = arith.constant dense<0.000000e+00> : vector<2xf32>
    %352 = vector.multi_reduction <add>, %349, %cst_152 [1] : vector<2x32xf32> to vector<2xf32>
    %353 = vector.shape_cast %352 : vector<2xf32> to vector<2x1xf32>
    %cst_153 = arith.constant 3.200000e+01 : f32
    %354 = vector.broadcast %cst_153 : f32 to vector<2x1xf32>
    %355 = arith.divf %353, %354 : vector<2x1xf32>
    %356 = vector.broadcast %355 : vector<2x1xf32> to vector<2x32xf32>
    %357 = arith.subf %349, %356 : vector<2x32xf32>
    %358 = arith.mulf %357, %357 : vector<2x32xf32>
    %cst_154 = arith.constant dense<0.000000e+00> : vector<2xf32>
    %359 = vector.multi_reduction <add>, %358, %cst_154 [1] : vector<2x32xf32> to vector<2xf32>
    %360 = vector.shape_cast %359 : vector<2xf32> to vector<2x1xf32>
    %cst_155 = arith.constant 3.200000e+01 : f32
    %361 = vector.broadcast %cst_155 : f32 to vector<2x1xf32>
    %362 = arith.divf %360, %361 : vector<2x1xf32>
    %363 = vector.broadcast %355 : vector<2x1xf32> to vector<2x32xf32>
    %364 = arith.subf %349, %363 : vector<2x32xf32>
    %cst_156 = arith.constant 9.99999997E-7 : f32
    %365 = vector.broadcast %cst_156 : f32 to vector<2x1xf32>
    %366 = arith.addf %362, %365 : vector<2x1xf32>
    %367 = math.rsqrt %366 : vector<2x1xf32>
    %368 = vector.broadcast %367 : vector<2x1xf32> to vector<2x32xf32>
    %369 = arith.mulf %364, %368 : vector<2x32xf32>
    %370 = vector.broadcast %350 : vector<1x32xf32> to vector<2x32xf32>
    %371 = arith.mulf %369, %370 : vector<2x32xf32>
    %372 = vector.broadcast %351 : vector<1x32xf32> to vector<2x32xf32>
    %373 = arith.addf %371, %372 : vector<2x32xf32>
    %c0_157 = arith.constant 0 : index
    %c0_158 = arith.constant 0 : index
    %374 = vector.load %arg18[%c0_157, %c0_158] : memref<32x16xbf16, #tpu.memory_space<vmem>>, vector<32x16xbf16>
    %c0_159 = arith.constant 0 : index
    %c0_160 = arith.constant 0 : index
    %375 = vector.load %arg19[%c0_159, %c0_160] : memref<1x16xf32, #tpu.memory_space<vmem>>, vector<1x16xf32>
    %376 = arith.truncf %373 : vector<2x32xf32> to vector<2x32xbf16>
    %cst_161 = arith.constant dense<0.000000e+00> : vector<2x16xf32>
    %377 = tpu.matmul %376, %374, %cst_161 {dimension_numbers = #tpu.dot_dimension_numbers<[1], [0], [0], [1], [0, 0, 1, 1], [], []>} : vector<2x32xbf16>, vector<32x16xbf16>, vector<2x16xf32> -> vector<2x16xf32>
    %378 = vector.broadcast %375 : vector<1x16xf32> to vector<2x16xf32>
    %379 = arith.addf %377, %378 : vector<2x16xf32>
    %c0_162 = arith.constant 0 : index
    %c0_163 = arith.constant 0 : index
    %380 = vector.load %arg20[%c0_162, %c0_163] : memref<16x32xbf16, #tpu.memory_space<vmem>>, vector<16x32xbf16>
    %c0_164 = arith.constant 0 : index
    %c0_165 = arith.constant 0 : index
    %381 = vector.load %arg21[%c0_164, %c0_165] : memref<1x32xf32, #tpu.memory_space<vmem>>, vector<1x32xf32>
    %382 = arith.truncf %379 : vector<2x16xf32> to vector<2x16xbf16>
    %cst_166 = arith.constant dense<0.000000e+00> : vector<2x32xf32>
    %383 = tpu.matmul %382, %380, %cst_166 {dimension_numbers = #tpu.dot_dimension_numbers<[1], [0], [0], [1], [0, 0, 1, 1], [], []>} : vector<2x16xbf16>, vector<16x32xbf16>, vector<2x32xf32> -> vector<2x32xf32>
    %384 = vector.broadcast %381 : vector<1x32xf32> to vector<2x32xf32>
    %385 = arith.addf %383, %384 : vector<2x32xf32>
    %386 = arith.mulf %385, %385 : vector<2x32xf32>
    %cst_167 = arith.constant 0.797884583 : f32
    %387 = vector.broadcast %cst_167 : f32 to vector<2x32xf32>
    %388 = arith.mulf %387, %385 : vector<2x32xf32>
    %cst_168 = arith.constant 4.471500e-02 : f32
    %389 = vector.broadcast %cst_168 : f32 to vector<2x32xf32>
    %390 = arith.mulf %389, %386 : vector<2x32xf32>
    %cst_169 = arith.constant 1.000000e+00 : f32
    %391 = vector.broadcast %cst_169 : f32 to vector<2x32xf32>
    %392 = arith.addf %391, %390 : vector<2x32xf32>
    %393 = arith.mulf %388, %392 : vector<2x32xf32>
    %394 = math.tanh %393 : vector<2x32xf32>
    %cst_170 = arith.constant 5.000000e-01 : f32
    %395 = vector.broadcast %cst_170 : f32 to vector<2x32xf32>
    %396 = arith.mulf %395, %394 : vector<2x32xf32>
    %cst_171 = arith.constant 5.000000e-01 : f32
    %397 = vector.broadcast %cst_171 : f32 to vector<2x32xf32>
    %398 = arith.addf %397, %396 : vector<2x32xf32>
    %399 = arith.mulf %385, %398 : vector<2x32xf32>
    %c0_172 = arith.constant 0 : index
    %c0_173 = arith.constant 0 : index
    %400 = vector.load %arg24[%c0_172, %c0_173] : memref<1x32xf32, #tpu.memory_space<vmem>>, vector<1x32xf32>
    %401 = vector.broadcast %400 : vector<1x32xf32> to vector<2x32xf32>
    %402 = arith.subf %399, %401 : vector<2x32xf32>
    %c0_174 = arith.constant 0 : index
    %c0_175 = arith.constant 0 : index
    %403 = vector.load %arg25[%c0_174, %c0_175] : memref<1x32xf32, #tpu.memory_space<vmem>>, vector<1x32xf32>
    %cst_176 = arith.constant 9.99999974E-6 : f32
    %404 = vector.broadcast %cst_176 : f32 to vector<1x32xf32>
    %405 = arith.addf %403, %404 : vector<1x32xf32>
    %406 = math.rsqrt %405 : vector<1x32xf32>
    %407 = vector.broadcast %406 : vector<1x32xf32> to vector<2x32xf32>
    %408 = arith.mulf %402, %407 : vector<2x32xf32>
    %c0_177 = arith.constant 0 : index
    %c0_178 = arith.constant 0 : index
    %409 = vector.load %arg22[%c0_177, %c0_178] : memref<1x32xf32, #tpu.memory_space<vmem>>, vector<1x32xf32>
    %410 = vector.broadcast %409 : vector<1x32xf32> to vector<2x32xf32>
    %411 = arith.mulf %408, %410 : vector<2x32xf32>
    %c0_179 = arith.constant 0 : index
    %c0_180 = arith.constant 0 : index
    %412 = vector.load %arg23[%c0_179, %c0_180] : memref<1x32xf32, #tpu.memory_space<vmem>>, vector<1x32xf32>
    %413 = vector.broadcast %412 : vector<1x32xf32> to vector<2x32xf32>
    %414 = arith.addf %411, %413 : vector<2x32xf32>
    %c0_181 = arith.constant 0 : index
    %c0_182 = arith.constant 0 : index
    %415 = vector.load %arg26[%c0_181, %c0_182] : memref<2x32xf32, #tpu.memory_space<vmem>>, vector<2x32xf32>
    tpu.vector_store %arg26[%c0_181, %c0_182], %414 {strides = array<i32>} : memref<2x32xf32, #tpu.memory_space<vmem>>, vector<2x32xf32>,
    return
  }
}

</mosaic_0001>

<llo_original>
// kernel: encoder_forward.1
$region0: #{encoder_forward.1}
  #allocation0 [shape = 'u32[]', space=smem, size = 0x4, offset = 0x4, fixed_abs, tag = 'smem constant byte address 0x4 - core index']
  #allocation1 [shape = 'u32[72,128]{1,0:T(1,128)}', space=vmem, size = 0x9000, scoped, tag = 'internal scratch']
  %s0 = inlined_call_operand.vmem [shape: f32[16,192], index: 0, kind: input, shape index: {}]
  %s1 = inlined_call_operand.vmem [shape: f32[16,16], index: 1, kind: input, shape index: {}]
  %s2 = inlined_call_operand.vmem [shape: f32[16,32], index: 2, kind: input, shape index: {}]
  %s3 = inlined_call_operand.vmem [shape: bf16[192,32], index: 3, kind: input, shape index: {}]
  %s4 = inlined_call_operand.vmem [shape: f32[2,1,32], index: 4, kind: input, shape index: {}]
  %s5 = inlined_call_operand.vmem [shape: f32[2,1,32], index: 5, kind: input, shape index: {}]
  %s6 = inlined_call_operand.vmem [shape: bf16[2,32,96], index: 6, kind: input, shape index: {}]
  %s7 = inlined_call_operand.vmem [shape: f32[2,1,96], index: 7, kind: input, shape index: {}]
  %s8 = inlined_call_operand.vmem [shape: bf16[2,32,32], index: 8, kind: input, shape index: {}]
  %s9 = inlined_call_operand.vmem [shape: f32[2,1,32], index: 9, kind: input, shape index: {}]
  %s10 = inlined_call_operand.vmem [shape: f32[2,1,32], index: 10, kind: input, shape index: {}]
  %s11 = inlined_call_operand.vmem [shape: f32[2,1,32], index: 11, kind: input, shape index: {}]
  %s12 = inlined_call_operand.vmem [shape: bf16[2,32,128], index: 12, kind: input, shape index: {}]
  %s13 = inlined_call_operand.vmem [shape: f32[2,1,128], index: 13, kind: input, shape index: {}]
  %s14 = inlined_call_operand.vmem [shape: bf16[2,128,32], index: 14, kind: input, shape index: {}]
  %s15 = inlined_call_operand.vmem [shape: f32[2,1,32], index: 15, kind: input, shape index: {}]
  %s16 = inlined_call_operand.vmem [shape: f32[1,32], index: 16, kind: input, shape index: {}]
  %s17 = inlined_call_operand.vmem [shape: f32[1,32], index: 17, kind: input, shape index: {}]
  %s18 = inlined_call_operand.vmem [shape: bf16[32,16], index: 18, kind: input, shape index: {}]
  %s19 = inlined_call_operand.vmem [shape: f32[1,16], index: 19, kind: input, shape index: {}]
  %s20 = inlined_call_operand.vmem [shape: bf16[16,32], index: 20, kind: input, shape index: {}]
  %s21 = inlined_call_operand.vmem [shape: f32[1,32], index: 21, kind: input, shape index: {}]
  %s22 = inlined_call_operand.vmem [shape: f32[1,32], index: 22, kind: input, shape index: {}]
  %s23 = inlined_call_operand.vmem [shape: f32[1,32], index: 23, kind: input, shape index: {}]
  %s24 = inlined_call_operand.vmem [shape: f32[1,32], index: 24, kind: input, shape index: {}]
  %s25 = inlined_call_operand.vmem [shape: f32[1,32], index: 25, kind: input, shape index: {}]
  %s26 = inlined_call_operand.hbm [shape: f32[2,32], index: 26, kind: output, shape index: {}]
  %s27 = sld [smem:[#allocation0]]
  $region114: #{encoder_forward.1} parent=0
    _
  %s29 = ssub.s32 1, %s27
  %s30 = scalar_select 0, %s29, %s27
  $region1: #{encoder_forward.1} parent=0
    #allocation2 [shape = 'u8[1024]{0}', space=vmem, size = 0x400, scoped, tag = 'output window, operand 0, single buffered']
    #allocation3 [shape = 's32[1]{0}', space=sflag, size = 0x4, scoped, tag = 'scoped memory for encoder_forward.1']
    %31 = vsyncpa [#allocation3], 0
    // Predicated region
    $region2: #{encoder_forward.1} parent=1 // pred_check
      _
    $region3: #{encoder_forward.1} parent=1 // pred_check_branch
      %33 = sbr.rel (0) target = $region5
    $region4: #{encoder_forward.1} parent=1 // pred_region
      _
    $region5: #{encoder_forward.1} parent=1 // pred_fallthru
      _
    // Predicated region
    $region6: #{encoder_forward.1} parent=1 // pred_check
      _
    $region7: #{encoder_forward.1} parent=1 // pred_check_branch
      %35 = sbr.rel (0) target = $region9
    $region8: #{encoder_forward.1} parent=1 // pred_region
      _
    $region9: #{encoder_forward.1} parent=1 // pred_fallthru
      _
    // Predicated region
    $region10: #{encoder_forward.1} parent=1 // pred_check
      _
    $region11: #{encoder_forward.1} parent=1 // pred_check_branch
      %37 = sbr.rel (0) target = $region13
    $region12: #{encoder_forward.1} parent=1 // pred_region
      _
    $region13: #{encoder_forward.1} parent=1 // pred_fallthru
      _
    // Predicated region
    $region14: #{encoder_forward.1} parent=1 // pred_check
      _
    $region15: #{encoder_forward.1} parent=1 // pred_check_branch
      %39 = sbr.rel (0) target = $region17
    $region16: #{encoder_forward.1} parent=1 // pred_region
      _
    $region17: #{encoder_forward.1} parent=1 // pred_fallthru
      _
    // Predicated region
    $region18: #{encoder_forward.1} parent=1 // pred_check
      _
    $region19: #{encoder_forward.1} parent=1 // pred_check_branch
      %41 = sbr.rel (0) target = $region21
    $region20: #{encoder_forward.1} parent=1 // pred_region
      _
    $region21: #{encoder_forward.1} parent=1 // pred_fallthru
      _
    // Predicated region
    $region22: #{encoder_forward.1} parent=1 // pred_check
      _
    $region23: #{encoder_forward.1} parent=1 // pred_check_branch
      %43 = sbr.rel (0) target = $region25
    $region24: #{encoder_forward.1} parent=1 // pred_region
      _
    $region25: #{encoder_forward.1} parent=1 // pred_fallthru
      _
    // Predicated region
    $region26: #{encoder_forward.1} parent=1 // pred_check
      _
    $region27: #{encoder_forward.1} parent=1 // pred_check_branch
      %45 = sbr.rel (0) target = $region29
    $region28: #{encoder_forward.1} parent=1 // pred_region
      _
    $region29: #{encoder_forward.1} parent=1 // pred_fallthru
      _
    // Predicated region
    $region30: #{encoder_forward.1} parent=1 // pred_check
      _
    $region31: #{encoder_forward.1} parent=1 // pred_check_branch
      %47 = sbr.rel (0) target = $region33
    $region32: #{encoder_forward.1} parent=1 // pred_region
      _
    $region33: #{encoder_forward.1} parent=1 // pred_fallthru
      _
    // Predicated region
    $region34: #{encoder_forward.1} parent=1 // pred_check
      _
    $region35: #{encoder_forward.1} parent=1 // pred_check_branch
      %49 = sbr.rel (0) target = $region37
    $region36: #{encoder_forward.1} parent=1 // pred_region
      _
    $region37: #{encoder_forward.1} parent=1 // pred_fallthru
      _
    // Predicated region
    $region38: #{encoder_forward.1} parent=1 // pred_check
      _
    $region39: #{encoder_forward.1} parent=1 // pred_check_branch
      %51 = sbr.rel (0) target = $region41
    $region40: #{encoder_forward.1} parent=1 // pred_region
      _
    $region41: #{encoder_forward.1} parent=1 // pred_fallthru
      _
    // Predicated region
    $region42: #{encoder_forward.1} parent=1 // pred_check
      _
    $region43: #{encoder_forward.1} parent=1 // pred_check_branch
      %53 = sbr.rel (0) target = $region45
    $region44: #{encoder_forward.1} parent=1 // pred_region
      _
    $region45: #{encoder_forward.1} parent=1 // pred_fallthru
      _
    // Predicated region
    $region46: #{encoder_forward.1} parent=1 // pred_check
      _
    $region47: #{encoder_forward.1} parent=1 // pred_check_branch
      %55 = sbr.rel (0) target = $region49
    $region48: #{encoder_forward.1} parent=1 // pred_region
      _
    $region49: #{encoder_forward.1} parent=1 // pred_fallthru
      _
    // Predicated region
    $region50: #{encoder_forward.1} parent=1 // pred_check
      _
    $region51: #{encoder_forward.1} parent=1 // pred_check_branch
      %57 = sbr.rel (0) target = $region53
    $region52: #{encoder_forward.1} parent=1 // pred_region
      _
    $region53: #{encoder_forward.1} parent=1 // pred_fallthru
      _
    // Predicated region
    $region54: #{encoder_forward.1} parent=1 // pred_check
      _
    $region55: #{encoder_forward.1} parent=1 // pred_check_branch
      %59 = sbr.rel (0) target = $region57
    $region56: #{encoder_forward.1} parent=1 // pred_region
      _
    $region57: #{encoder_forward.1} parent=1 // pred_fallthru
      _
    // Predicated region
    $region58: #{encoder_forward.1} parent=1 // pred_check
      _
    $region59: #{encoder_forward.1} parent=1 // pred_check_branch
      %61 = sbr.rel (0) target = $region61
    $region60: #{encoder_forward.1} parent=1 // pred_region
      _
    $region61: #{encoder_forward.1} parent=1 // pred_fallthru
      _
    // Predicated region
    $region62: #{encoder_forward.1} parent=1 // pred_check
      _
    $region63: #{encoder_forward.1} parent=1 // pred_check_branch
      %63 = sbr.rel (0) target = $region65
    $region64: #{encoder_forward.1} parent=1 // pred_region
      _
    $region65: #{encoder_forward.1} parent=1 // pred_fallthru
      _
    // Predicated region
    $region66: #{encoder_forward.1} parent=1 // pred_check
      _
    $region67: #{encoder_forward.1} parent=1 // pred_check_branch
      %65 = sbr.rel (0) target = $region69
    $region68: #{encoder_forward.1} parent=1 // pred_region
      _
    $region69: #{encoder_forward.1} parent=1 // pred_fallthru
      _
    // Predicated region
    $region70: #{encoder_forward.1} parent=1 // pred_check
      _
    $region71: #{encoder_forward.1} parent=1 // pred_check_branch
      %67 = sbr.rel (0) target = $region73
    $region72: #{encoder_forward.1} parent=1 // pred_region
      _
    $region73: #{encoder_forward.1} parent=1 // pred_fallthru
      _
    // Predicated region
    $region74: #{encoder_forward.1} parent=1 // pred_check
      _
    $region75: #{encoder_forward.1} parent=1 // pred_check_branch
      %69 = sbr.rel (0) target = $region77
    $region76: #{encoder_forward.1} parent=1 // pred_region
      _
    $region77: #{encoder_forward.1} parent=1 // pred_fallthru
      _
    // Predicated region
    $region78: #{encoder_forward.1} parent=1 // pred_check
      _
    $region79: #{encoder_forward.1} parent=1 // pred_check_branch
      %71 = sbr.rel (0) target = $region81
    $region80: #{encoder_forward.1} parent=1 // pred_region
      _
    $region81: #{encoder_forward.1} parent=1 // pred_fallthru
      _
    // Predicated region
    $region82: #{encoder_forward.1} parent=1 // pred_check
      _
    $region83: #{encoder_forward.1} parent=1 // pred_check_branch
      %73 = sbr.rel (0) target = $region85
    $region84: #{encoder_forward.1} parent=1 // pred_region
      _
    $region85: #{encoder_forward.1} parent=1 // pred_fallthru
      _
    // Predicated region
    $region86: #{encoder_forward.1} parent=1 // pred_check
      _
    $region87: #{encoder_forward.1} parent=1 // pred_check_branch
      %75 = sbr.rel (0) target = $region89
    $region88: #{encoder_forward.1} parent=1 // pred_region
      _
    $region89: #{encoder_forward.1} parent=1 // pred_fallthru
      _
    // Predicated region
    $region90: #{encoder_forward.1} parent=1 // pred_check
      _
    $region91: #{encoder_forward.1} parent=1 // pred_check_branch
      %77 = sbr.rel (0) target = $region93
    $region92: #{encoder_forward.1} parent=1 // pred_region
      _
    $region93: #{encoder_forward.1} parent=1 // pred_fallthru
      _
    // Predicated region
    $region94: #{encoder_forward.1} parent=1 // pred_check
      _
    $region95: #{encoder_forward.1} parent=1 // pred_check_branch
      %79 = sbr.rel (0) target = $region97
    $region96: #{encoder_forward.1} parent=1 // pred_region
      _
    $region97: #{encoder_forward.1} parent=1 // pred_fallthru
      _
    // Predicated region
    $region98: #{encoder_forward.1} parent=1 // pred_check
      _
    $region99: #{encoder_forward.1} parent=1 // pred_check_branch
      %81 = sbr.rel (0) target = $region101
    $region100: #{encoder_forward.1} parent=1 // pred_region
      _
    $region101: #{encoder_forward.1} parent=1 // pred_fallthru
      _
    // Predicated region
    $region102: #{encoder_forward.1} parent=1 // pred_check
      _
    $region103: #{encoder_forward.1} parent=1 // pred_check_branch
      %83 = sbr.rel (0) target = $region105
    $region104: #{encoder_forward.1} parent=1 // pred_region
      _
    $region105: #{encoder_forward.1} parent=1 // pred_fallthru
      _
    %v85 = vld [vmem:[%s1] sm:$0xff]
    %v86 = vld [vmem:[%s1 + $0x8] sm:$0xff]
    %v87 = vld [vmem:[%s0] sm:$0xff]
    %v88 = vld [vmem:[%s0 + $0x8] sm:$0xff]
    %v89 = vld [vmem:[%s0 + $0x10] sm:$0xff]
    %v90 = vld [vmem:[%s0 + $0x18] sm:$0xff]
    %v91 = vld [vmem:[%s3] sm:$0xf]
    %v92 = vld [vmem:[%s3 + $0x4] sm:$0xf]
    %v93 = vld [vmem:[%s3 + $0x8] sm:$0xf]
    %v94 = vld [vmem:[%s3 + $0xc] sm:$0xf]
    %v95 = vld [vmem:[%s3 + $0x10] sm:$0xf]
    %v96 = vld [vmem:[%s3 + $0x14] sm:$0xf]
    %v97 = vld [vmem:[%s3 + $0x18] sm:$0xf]
    %v98 = vld [vmem:[%s3 + $0x1c] sm:$0xf]
    %v99 = vld [vmem:[%s3 + $0x20] sm:$0xf]
    %v100 = vld [vmem:[%s3 + $0x24] sm:$0xf]
    %v101 = vld [vmem:[%s3 + $0x28] sm:$0xf]
    %v102 = vld [vmem:[%s3 + $0x2c] sm:$0xf]
    %v103 = vld [vmem:[%s3 + $0x30] sm:$0xf]
    %v104 = vld [vmem:[%s3 + $0x34] sm:$0xf]
    %v105 = vld [vmem:[%s3 + $0x38] sm:$0xf]
    %v106 = vld [vmem:[%s3 + $0x3c] sm:$0xf]
    %v107 = vld [vmem:[%s3 + $0x40] sm:$0xf]
    %v108 = vld [vmem:[%s3 + $0x44] sm:$0xf]
    %v109 = vld [vmem:[%s3 + $0x48] sm:$0xf]
    %v110 = vld [vmem:[%s3 + $0x4c] sm:$0xf]
    %v111 = vld [vmem:[%s3 + $0x50] sm:$0xf]
    %v112 = vld [vmem:[%s3 + $0x54] sm:$0xf]
    %v113 = vld [vmem:[%s3 + $0x58] sm:$0xf]
    %v114 = vld [vmem:[%s3 + $0x5c] sm:$0xf]
    %v115 = vld [vmem:[%s2] sm:$0xff]
    %v116 = vld [vmem:[%s2 + $0x8] sm:$0xff]
    %v117 = vpack.c.bf16 %v89, %v87
    %v118 = vpack.c.bf16 %v90, %v88
    %v143 = vunpack.c.l.b16 %v91
    %v144 = vunpack.c.l.b16 %v92
    %v145 = vunpack.c.l.b16 %v93
    %v146 = vunpack.c.l.b16 %v94
    %v147 = vunpack.c.l.b16 %v95
    %v148 = vunpack.c.l.b16 %v96
    %v149 = vunpack.c.l.b16 %v97
    %v150 = vunpack.c.l.b16 %v98
    %v151 = vunpack.c.l.b16 %v99
    %v152 = vunpack.c.l.b16 %v100
    %v153 = vunpack.c.l.b16 %v101
    %v154 = vunpack.c.l.b16 %v102
    %v155 = vunpack.c.l.b16 %v103
    %v156 = vunpack.c.l.b16 %v104
    %v157 = vunpack.c.l.b16 %v105
    %v158 = vunpack.c.l.b16 %v106
    %v159 = vunpack.c.l.b16 %v107
    %v160 = vunpack.c.l.b16 %v108
    %v161 = vunpack.c.l.b16 %v109
    %v162 = vunpack.c.l.b16 %v110
    %v163 = vunpack.c.l.b16 %v111
    %v164 = vunpack.c.l.b16 %v112
    %v165 = vunpack.c.l.b16 %v113
    %v166 = vunpack.c.l.b16 %v114
    %v167 = vpack.c.b16 %v144, %v143
    %v168 = vpack.c.b16 %v146, %v145
    %v169 = vpack.c.b16 %v148, %v147
    %v170 = vpack.c.b16 %v150, %v149
    %v171 = vpack.c.b16 %v152, %v151
    %v172 = vpack.c.b16 %v154, %v153
    %v173 = vpack.c.b16 %v156, %v155
    %v174 = vpack.c.b16 %v158, %v157
    %v175 = vpack.c.b16 %v160, %v159
    %v176 = vpack.c.b16 %v162, %v161
    %v177 = vpack.c.b16 %v164, %v163
    %v178 = vpack.c.b16 %v166, %v165
    %vm191 = vcmask 523264
    %v193 = vsel %vm191, %v118, 0
    %195 = vmatpush.bf16.msra.mxu0 %v174
    %196 = vmatpush.bf16.msra.mxu0 %v173
    %197 = vmatpush.bf16.msra.mxu0 %v172
    %198 = vmatpush.bf16.msra.mxu0 %v171
    %199 = vmatpush.bf16.msra.mxu0 %v170
    %200 = vmatpush.bf16.msra.mxu0 %v169
    %201 = vmatpush.bf16.msra.mxu0 %v168
    %202 = vmatpush.bf16.msra.mxu0 %v167
    %203 = vmatmul.bf16.gmra.mxu0 %v117
    %v204 = vpop.f32.mrf.mxu0
    %v205 = vadd.f32 %v115, %v204
    %v206 = vpop.f32.mrf.mxu0
    %v207 = vadd.f32 %v116, %v206
    %208 = vdwg.mxu0
    %209 = vmatpush.bf16.msra.mxu0 0
    %210 = vmatpush.bf16.msra.mxu0 0
    %211 = vmatpush.bf16.msra.mxu0 0
    %212 = vmatpush.bf16.msra.mxu0 0
    %213 = vmatpush.bf16.msra.mxu0 %v178
    %214 = vmatpush.bf16.msra.mxu0 %v177
    %215 = vmatpush.bf16.msra.mxu0 %v176
    %216 = vmatpush.bf16.msra.mxu0 %v175
    %217 = vmatmul.bf16.gmra.mxu0 %v193
    %v218 = vpop.f32.mrf.mxu0
    %v219 = vadd.f32 %v205, %v218
    %v220 = vpop.f32.mrf.mxu0
    %v221 = vadd.f32 %v207, %v220
    %222 = vdwg.mxu0
    %v223 = vld [vmem:[%s4] sm:$0x1]
    %v224 = vld [vmem:[%s5] sm:$0x1]
    %vm225 = vcmask 261120
    %v226 = vsel %vm225, %v219, 0.0
    %227 = vadd.xlane.f32.xlu0 %v226
    %v228 = vpop.xlane.xlu0 %227
    %v229 = vsel %vm225, %v221, 0.0
    %230 = vadd.xlane.f32.xlu0 %v229
    %v231 = vpop.xlane.xlu0 %230
    %v232 = vrcp.pop 32.0
    %v233 = vmul.f32 32.0, %v232
    %v234 = vsub.f32 1.0, %v233
    %v235 = vmul.f32 %v232, %v234
    %v236 = vadd.f32 %v232, %v235
    %vm237 = vweird.f32 %v232
    %v238 = vsel %vm237, %v232, %v236
    %v239 = vmul.f32 %v228, %v238
    %v240 = vmul.f32 %v231, %v238
    %v241 = vsub.f32 %v219, %v239
    %v242 = vsub.f32 %v221, %v240
    %v243 = vmul.f32 %v241, %v241
    %v244 = vmul.f32 %v242, %v242
    %v245 = vsel %vm225, %v243, 0.0
    %246 = vadd.xlane.f32.xlu0 %v245
    %v247 = vpop.xlane.xlu0 %246
    %v248 = vsel %vm225, %v244, 0.0
    %249 = vadd.xlane.f32.xlu0 %v248
    %v250 = vpop.xlane.xlu0 %249
    %v251 = vmul.f32 %v247, %v238
    %v252 = vmul.f32 %v250, %v238
    %v253 = vadd.f32 %v251, 1e-06
    %v254 = vadd.f32 %v252, 1e-06
    %v255 = vrsqrt.pop %v253
    %v256 = vmul.f32 %v255, %v253
    %v257 = vmul.f32 %v256, %v255
    %v258 = vmul.f32 0.5, %v257
    %v259 = vsub.f32 1.5, %v258
    %v260 = vmul.f32 %v255, %v259
    %vm261 = vweird.f32 %v253
    %vm262 = vweird.f32 %v255
    %vm263 = vmor %vm261, %vm262
    %v264 = vsel %vm263, %v255, %v260
    %v265 = vrsqrt.pop %v254
    %v266 = vmul.f32 %v265, %v254
    %v267 = vmul.f32 %v266, %v265
    %v268 = vmul.f32 0.5, %v267
    %v269 = vsub.f32 1.5, %v268
    %v270 = vmul.f32 %v265, %v269
    %vm271 = vweird.f32 %v254
    %vm272 = vweird.f32 %v265
    %vm273 = vmor %vm271, %vm272
    %v274 = vsel %vm273, %v265, %v270
    %v275 = vmul.f32 %v241, %v264
    %v276 = vmul.f32 %v242, %v274
    %v278 = vperm.slane %v223, 0
    %v280 = vmul.f32 %v275, %v278
    %v281 = vmul.f32 %v276, %v278
    %v283 = vperm.slane %v224, 0
    %v285 = vadd.f32 %v280, %v283
    %v286 = vadd.f32 %v281, %v283
    %v287 = vld [vmem:[%s6] sm:$0xf]
    %v288 = vld [vmem:[%s6 + $0x4] sm:$0xf]
    %v289 = vld [vmem:[%s6 + $0x8] sm:$0xf]
    %v290 = vld [vmem:[%s6 + $0xc] sm:$0xf]
    %v291 = vld [vmem:[%s7] sm:$0x1]
    %v292 = vpack.c.bf16 %v286, %v285
    %v294 = vperm.slane %v291, 0
    %v300 = vunpack.c.l.b16 %v287
    %v301 = vunpack.c.l.b16 %v288
    %v302 = vunpack.c.l.b16 %v289
    %v303 = vunpack.c.l.b16 %v290
    %v304 = vpack.c.b16 %v301, %v300
    %v305 = vpack.c.b16 %v303, %v302
    %v309 = vsel %vm225, %v292, 0
    %311 = vmatpush.bf16.msra.mxu0 0
    %312 = vmatpush.bf16.msra.mxu0 0
    %313 = vmatpush.bf16.msra.mxu0 0
    %314 = vmatpush.bf16.msra.mxu0 0
    %315 = vmatpush.bf16.msra.mxu0 0
    %316 = vmatpush.bf16.msra.mxu0 0
    %317 = vmatpush.bf16.msra.mxu0 %v305
    %318 = vmatpush.bf16.msra.mxu0 %v304
    %319 = vmatmul.bf16.gmra.mxu0 %v309
    %v320 = vpop.f32.mrf.mxu0
    %v321 = vadd.f32 %v294, %v320
    %v322 = vpop.f32.mrf.mxu0
    %v323 = vadd.f32 %v294, %v322
    %324 = vdwg.mxu0
    %v325 = vpack.c.bf16 %v321, %v321
    %v326 = vpack.c.bf16 %v323, %v323
    %v329 = vunpack.c.l.b16 %v325
    %v330 = vunpack.c.l.b16 %v326
    %v331 = vpack.c.b16 %v330, %v329
    %332 = vrot.lane.b32.xlu0 %v331, 96
    %v333 = vpop.permute.xlu0 %332
    %vm334 = vcmask 64512
    %v336 = vsel %vm334, %v331, 0
    %v339 = vsel %vm334, %v333, 0
    %341 = vmatpush.bf16.xpose.msra.mxu0 0
    %342 = vmatpush.bf16.xpose.msra.mxu0 0
    %343 = vmatpush.bf16.xpose.msra.mxu0 0
    %344 = vmatpush.bf16.xpose.msra.mxu0 0
    %345 = vmatpush.bf16.xpose.msra.mxu0 0
    %346 = vmatpush.bf16.xpose.msra.mxu0 0
    %347 = vmatpush.bf16.xpose.msra.mxu0 0
    %348 = vmatpush.bf16.xpose.msra.mxu0 %v339
    %349 = vmatmul.bf16.gmra.mxu0 %v336
    %v350 = vpop.f32.mrf.mxu0
    %v351 = vadd.f32 %v85, %v350
    %v352 = vpop.f32.mrf.mxu0
    %v353 = vadd.f32 %v86, %v352
    %354 = vdwg.mxu0
    %vm355 = vcmask 130048
    %v356 = vsel %vm355, %v351, -inf
    %357 = vmax.xlane.f32.xlu0 %v356
    %v358 = vpop.xlane.xlu0 %357
    %v359 = vsel %vm355, %v353, -inf
    %360 = vmax.xlane.f32.xlu0 %v359
    %v361 = vpop.xlane.xlu0 %360
    %v362 = vsub.f32 %v351, %v358
    %v363 = vsub.f32 %v353, %v361
    %v364 = vmul.f32 %v362, 1.442695
    %v365 = vpow.pop %v364
    %v366 = vmul.f32 %v363, 1.442695
    %v367 = vpow.pop %v366
    %v368 = vsel %vm355, %v365, 0.0
    %369 = vadd.xlane.f32.xlu0 %v368
    %v370 = vpop.xlane.xlu0 %369
    %v371 = vsel %vm355, %v367, 0.0
    %372 = vadd.xlane.f32.xlu0 %v371
    %v373 = vpop.xlane.xlu0 %372
    %v374 = vrcp.pop %v370
    %v375 = vrcp.pop %v373
    %v376 = vmul.f32 %v365, %v374
    %v377 = vmul.f32 %v367, %v375
    %v378 = vpack.c.bf16 %v377, %v376
    %379 = vrot.lane.b32.xlu0 %v331, 64
    %v380 = vpop.permute.xlu0 %379
    %v383 = vsel %vm355, %v378, 0
    %385 = vmatpush.bf16.msra.mxu0 0
    %386 = vmatpush.bf16.msra.mxu0 0
    %387 = vmatpush.bf16.msra.mxu0 0
    %388 = vmatpush.bf16.msra.mxu0 0
    %389 = vmatpush.bf16.msra.mxu0 0
    %390 = vmatpush.bf16.msra.mxu0 0
    %391 = vmatpush.bf16.msra.mxu0 0
    %392 = vmatpush.bf16.msra.mxu0 %v380
    %393 = vmatmul.bf16.gmra.mxu0 %v383
    %v394 = vpop.f32.mrf.mxu0
    %v395 = vadd.f32 0.0, %v394
    %v396 = vpop.f32.mrf.mxu0
    %v397 = vadd.f32 0.0, %v396
    %398 = vdwg.mxu0
    %399 = vrot.lane.b32.xlu0 %v331, 120
    %v400 = vpop.permute.xlu0 %399
    %401 = vrot.lane.b32.xlu0 %v331, 88
    %v402 = vpop.permute.xlu0 %401
    %v404 = vsel %vm334, %v400, 0
    %v407 = vsel %vm334, %v402, 0
    %409 = vmatpush.bf16.xpose.msra.mxu0 0
    %410 = vmatpush.bf16.xpose.msra.mxu0 0
    %411 = vmatpush.bf16.xpose.msra.mxu0 0
    %412 = vmatpush.bf16.xpose.msra.mxu0 0
    %413 = vmatpush.bf16.xpose.msra.mxu0 0
    %414 = vmatpush.bf16.xpose.msra.mxu0 0
    %415 = vmatpush.bf16.xpose.msra.mxu0 0
    %416 = vmatpush.bf16.xpose.msra.mxu0 %v407
    %417 = vmatmul.bf16.gmra.mxu0 %v404
    %v418 = vpop.f32.mrf.mxu0
    %v419 = vadd.f32 %v85, %v418
    %v420 = vpop.f32.mrf.mxu0
    %v421 = vadd.f32 %v86, %v420
    %422 = vdwg.mxu0
    %v423 = vsel %vm355, %v419, -inf
    %424 = vmax.xlane.f32.xlu0 %v423
    %v425 = vpop.xlane.xlu0 %424
    %v426 = vsel %vm355, %v421, -inf
    %427 = vmax.xlane.f32.xlu0 %v426
    %v428 = vpop.xlane.xlu0 %427
    %v429 = vsub.f32 %v419, %v425
    %v430 = vsub.f32 %v421, %v428
    %v431 = vmul.f32 %v429, 1.442695
    %v432 = vpow.pop %v431
    %v433 = vmul.f32 %v430, 1.442695
    %v434 = vpow.pop %v433
    %v435 = vsel %vm355, %v432, 0.0
    %436 = vadd.xlane.f32.xlu0 %v435
    %v437 = vpop.xlane.xlu0 %436
    %v438 = vsel %vm355, %v434, 0.0
    %439 = vadd.xlane.f32.xlu0 %v438
    %v440 = vpop.xlane.xlu0 %439
    %v441 = vrcp.pop %v437
    %v442 = vrcp.pop %v440
    %v443 = vmul.f32 %v432, %v441
    %v444 = vmul.f32 %v434, %v442
    %v445 = vpack.c.bf16 %v444, %v443
    %446 = vrot.lane.b32.xlu0 %v331, 56
    %v447 = vpop.permute.xlu0 %446
    %v450 = vsel %vm355, %v445, 0
    %452 = vmatpush.bf16.msra.mxu0 0
    %453 = vmatpush.bf16.msra.mxu0 0
    %454 = vmatpush.bf16.msra.mxu0 0
    %455 = vmatpush.bf16.msra.mxu0 0
    %456 = vmatpush.bf16.msra.mxu0 0
    %457 = vmatpush.bf16.msra.mxu0 0
    %458 = vmatpush.bf16.msra.mxu0 0
    %459 = vmatpush.bf16.msra.mxu0 %v447
    %460 = vmatmul.bf16.gmra.mxu0 %v450
    %v461 = vpop.f32.mrf.mxu0
    %v462 = vadd.f32 0.0, %v461
    %v463 = vpop.f32.mrf.mxu0
    %v464 = vadd.f32 0.0, %v463
    %465 = vdwg.mxu0
    %466 = vrot.lane.b32.xlu0 %v331, 112
    %v467 = vpop.permute.xlu0 %466
    %468 = vrot.lane.b32.xlu0 %v331, 80
    %v469 = vpop.permute.xlu0 %468
    %v471 = vsel %vm334, %v467, 0
    %v474 = vsel %vm334, %v469, 0
    %476 = vmatpush.bf16.xpose.msra.mxu0 0
    %477 = vmatpush.bf16.xpose.msra.mxu0 0
    %478 = vmatpush.bf16.xpose.msra.mxu0 0
    %479 = vmatpush.bf16.xpose.msra.mxu0 0
    %480 = vmatpush.bf16.xpose.msra.mxu0 0
    %481 = vmatpush.bf16.xpose.msra.mxu0 0
    %482 = vmatpush.bf16.xpose.msra.mxu0 0
    %483 = vmatpush.bf16.xpose.msra.mxu0 %v474
    %484 = vmatmul.bf16.gmra.mxu0 %v471
    %v485 = vpop.f32.mrf.mxu0
    %v486 = vadd.f32 %v85, %v485
    %v487 = vpop.f32.mrf.mxu0
    %v488 = vadd.f32 %v86, %v487
    %489 = vdwg.mxu0
    %v490 = vsel %vm355, %v486, -inf
    %491 = vmax.xlane.f32.xlu0 %v490
    %v492 = vpop.xlane.xlu0 %491
    %v493 = vsel %vm355, %v488, -inf
    %494 = vmax.xlane.f32.xlu0 %v493
    %v495 = vpop.xlane.xlu0 %494
    %v496 = vsub.f32 %v486, %v492
    %v497 = vsub.f32 %v488, %v495
    %v498 = vmul.f32 %v496, 1.442695
    %v499 = vpow.pop %v498
    %v500 = vmul.f32 %v497, 1.442695
    %v501 = vpow.pop %v500
    %v502 = vsel %vm355, %v499, 0.0
    %503 = vadd.xlane.f32.xlu0 %v502
    %v504 = vpop.xlane.xlu0 %503
    %v505 = vsel %vm355, %v501, 0.0
    %506 = vadd.xlane.f32.xlu0 %v505
    %v507 = vpop.xlane.xlu0 %506
    %v508 = vrcp.pop %v504
    %v509 = vrcp.pop %v507
    %v510 = vmul.f32 %v499, %v508
    %v511 = vmul.f32 %v501, %v509
    %v512 = vpack.c.bf16 %v511, %v510
    %513 = vrot.lane.b32.xlu0 %v331, 48
    %v514 = vpop.permute.xlu0 %513
    %v517 = vsel %vm355, %v512, 0
    %519 = vmatpush.bf16.msra.mxu0 0
    %520 = vmatpush.bf16.msra.mxu0 0
    %521 = vmatpush.bf16.msra.mxu0 0
    %522 = vmatpush.bf16.msra.mxu0 0
    %523 = vmatpush.bf16.msra.mxu0 0
    %524 = vmatpush.bf16.msra.mxu0 0
    %525 = vmatpush.bf16.msra.mxu0 0
    %526 = vmatpush.bf16.msra.mxu0 %v514
    %527 = vmatmul.bf16.gmra.mxu0 %v517
    %v528 = vpop.f32.mrf.mxu0
    %v529 = vadd.f32 0.0, %v528
    %v530 = vpop.f32.mrf.mxu0
    %v531 = vadd.f32 0.0, %v530
    %532 = vdwg.mxu0
    %533 = vrot.lane.b32.xlu0 %v331, 104
    %v534 = vpop.permute.xlu0 %533
    %535 = vrot.lane.b32.xlu0 %v331, 72
    %v536 = vpop.permute.xlu0 %535
    %v538 = vsel %vm334, %v534, 0
    %v541 = vsel %vm334, %v536, 0
    %543 = vmatpush.bf16.xpose.msra.mxu0 0
    %544 = vmatpush.bf16.xpose.msra.mxu0 0
    %545 = vmatpush.bf16.xpose.msra.mxu0 0
    %546 = vmatpush.bf16.xpose.msra.mxu0 0
    %547 = vmatpush.bf16.xpose.msra.mxu0 0
    %548 = vmatpush.bf16.xpose.msra.mxu0 0
    %549 = vmatpush.bf16.xpose.msra.mxu0 0
    %550 = vmatpush.bf16.xpose.msra.mxu0 %v541
    %551 = vmatmul.bf16.gmra.mxu0 %v538
    %v552 = vpop.f32.mrf.mxu0
    %v553 = vadd.f32 %v85, %v552
    %v554 = vpop.f32.mrf.mxu0
    %v555 = vadd.f32 %v86, %v554
    %556 = vdwg.mxu0
    %v557 = vsel %vm355, %v553, -inf
    %558 = vmax.xlane.f32.xlu0 %v557
    %v559 = vpop.xlane.xlu0 %558
    %v560 = vsel %vm355, %v555, -inf
    %561 = vmax.xlane.f32.xlu0 %v560
    %v562 = vpop.xlane.xlu0 %561
    %v563 = vsub.f32 %v553, %v559
    %v564 = vsub.f32 %v555, %v562
    %v565 = vmul.f32 %v563, 1.442695
    %v566 = vpow.pop %v565
    %v567 = vmul.f32 %v564, 1.442695
    %v568 = vpow.pop %v567
    %v569 = vsel %vm355, %v566, 0.0
    %570 = vadd.xlane.f32.xlu0 %v569
    %v571 = vpop.xlane.xlu0 %570
    %v572 = vsel %vm355, %v568, 0.0
    %573 = vadd.xlane.f32.xlu0 %v572
    %v574 = vpop.xlane.xlu0 %573
    %v575 = vrcp.pop %v571
    %v576 = vrcp.pop %v574
    %v577 = vmul.f32 %v566, %v575
    %v578 = vmul.f32 %v568, %v576
    %v579 = vpack.c.bf16 %v578, %v577
    %580 = vrot.lane.b32.xlu0 %v331, 40
    %v581 = vpop.permute.xlu0 %580
    %v584 = vsel %vm355, %v579, 0
    %586 = vmatpush.bf16.msra.mxu0 0
    %587 = vmatpush.bf16.msra.mxu0 0
    %588 = vmatpush.bf16.msra.mxu0 0
    %589 = vmatpush.bf16.msra.mxu0 0
    %590 = vmatpush.bf16.msra.mxu0 0
    %591 = vmatpush.bf16.msra.mxu0 0
    %592 = vmatpush.bf16.msra.mxu0 0
    %593 = vmatpush.bf16.msra.mxu0 %v581
    %594 = vmatmul.bf16.gmra.mxu0 %v584
    %v595 = vpop.f32.mrf.mxu0
    %v596 = vadd.f32 0.0, %v595
    %v597 = vpop.f32.mrf.mxu0
    %v598 = vadd.f32 0.0, %v597
    %599 = vdwg.mxu0
    %602 = vrot.lane.b32.xlu0 %v462, 8
    %v603 = vpop.permute.xlu0 %602
    %604 = vrot.lane.b32.xlu0 %v464, 8
    %v605 = vpop.permute.xlu0 %604
    %610 = vrot.lane.b32.xlu0 %v529, 16
    %v611 = vpop.permute.xlu0 %610
    %612 = vrot.lane.b32.xlu0 %v531, 16
    %v613 = vpop.permute.xlu0 %612
    %618 = vrot.lane.b32.xlu0 %v596, 24
    %v619 = vpop.permute.xlu0 %618
    %620 = vrot.lane.b32.xlu0 %v598, 24
    %v621 = vpop.permute.xlu0 %620
    %v624 = vsel %vm334, %v395, %v603
    %v625 = vsel %vm334, %v397, %v605
    %v626 = vsel %vm355, %v624, %v611
    %v627 = vsel %vm355, %v625, %v613
    %vm628 = vcmask 195584
    %v629 = vsel %vm628, %v626, %v619
    %v630 = vsel %vm628, %v627, %v621
    %v631 = vld [vmem:[%s8] sm:$0xf]
    %v632 = vld [vmem:[%s8 + $0x4] sm:$0xf]
    %v633 = vld [vmem:[%s8 + $0x8] sm:$0xf]
    %v634 = vld [vmem:[%s8 + $0xc] sm:$0xf]
    %v635 = vld [vmem:[%s9] sm:$0x1]
    %v636 = vpack.c.bf16 %v630, %v629
    %v638 = vperm.slane %v635, 0
    %v644 = vunpack.c.l.b16 %v631
    %v645 = vunpack.c.l.b16 %v632
    %v646 = vunpack.c.l.b16 %v633
    %v647 = vunpack.c.l.b16 %v634
    %v648 = vpack.c.b16 %v645, %v644
    %v649 = vpack.c.b16 %v647, %v646
    %v653 = vsel %vm225, %v636, 0
    %655 = vmatpush.bf16.msra.mxu0 0
    %656 = vmatpush.bf16.msra.mxu0 0
    %657 = vmatpush.bf16.msra.mxu0 0
    %658 = vmatpush.bf16.msra.mxu0 0
    %659 = vmatpush.bf16.msra.mxu0 0
    %660 = vmatpush.bf16.msra.mxu0 0
    %661 = vmatpush.bf16.msra.mxu0 %v649
    %662 = vmatpush.bf16.msra.mxu0 %v648
    %663 = vmatmul.bf16.gmra.mxu0 %v653
    %v664 = vpop.f32.mrf.mxu0
    %v665 = vadd.f32 %v638, %v664
    %v666 = vpop.f32.mrf.mxu0
    %v667 = vadd.f32 %v638, %v666
    %668 = vdwg.mxu0
    %v669 = vadd.f32 %v219, %v665
    %v670 = vadd.f32 %v221, %v667
    %v671 = vld [vmem:[%s10] sm:$0x1]
    %v672 = vld [vmem:[%s11] sm:$0x1]
    %v673 = vsel %vm225, %v669, 0.0
    %674 = vadd.xlane.f32.xlu0 %v673
    %v675 = vpop.xlane.xlu0 %674
    %v676 = vsel %vm225, %v670, 0.0
    %677 = vadd.xlane.f32.xlu0 %v676
    %v678 = vpop.xlane.xlu0 %677
    %v679 = vmul.f32 %v675, %v238
    %v680 = vmul.f32 %v678, %v238
    %v681 = vsub.f32 %v669, %v679
    %v682 = vsub.f32 %v670, %v680
    %v683 = vmul.f32 %v681, %v681
    %v684 = vmul.f32 %v682, %v682
    %v685 = vsel %vm225, %v683, 0.0
    %686 = vadd.xlane.f32.xlu0 %v685
    %v687 = vpop.xlane.xlu0 %686
    %v688 = vsel %vm225, %v684, 0.0
    %689 = vadd.xlane.f32.xlu0 %v688
    %v690 = vpop.xlane.xlu0 %689
    %v691 = vmul.f32 %v687, %v238
    %v692 = vmul.f32 %v690, %v238
    %v693 = vadd.f32 %v691, 1e-06
    %v694 = vadd.f32 %v692, 1e-06
    %v695 = vrsqrt.pop %v693
    %v696 = vmul.f32 %v695, %v693
    %v697 = vmul.f32 %v696, %v695
    %v698 = vmul.f32 0.5, %v697
    %v699 = vsub.f32 1.5, %v698
    %v700 = vmul.f32 %v695, %v699
    %vm701 = vweird.f32 %v693
    %vm702 = vweird.f32 %v695
    %vm703 = vmor %vm701, %vm702
    %v704 = vsel %vm703, %v695, %v700
    %v705 = vrsqrt.pop %v694
    %v706 = vmul.f32 %v705, %v694
    %v707 = vmul.f32 %v706, %v705
    %v708 = vmul.f32 0.5, %v707
    %v709 = vsub.f32 1.5, %v708
    %v710 = vmul.f32 %v705, %v709
    %vm711 = vweird.f32 %v694
    %vm712 = vweird.f32 %v705
    %vm713 = vmor %vm711, %vm712
    %v714 = vsel %vm713, %v705, %v710
    %v715 = vmul.f32 %v681, %v704
    %v716 = vmul.f32 %v682, %v714
    %v718 = vperm.slane %v671, 0
    %v720 = vmul.f32 %v715, %v718
    %v721 = vmul.f32 %v716, %v718
    %v723 = vperm.slane %v672, 0
    %v725 = vadd.f32 %v720, %v723
    %v726 = vadd.f32 %v721, %v723
    %v727 = vld [vmem:[%s12] sm:$0xf]
    %v728 = vld [vmem:[%s12 + $0x4] sm:$0xf]
    %v729 = vld [vmem:[%s12 + $0x8] sm:$0xf]
    %v730 = vld [vmem:[%s12 + $0xc] sm:$0xf]
    %v731 = vld [vmem:[%s13] sm:$0x1]
    %v732 = vpack.c.bf16 %v726, %v725
    %v734 = vperm.slane %v731, 0
    %v740 = vunpack.c.l.b16 %v727
    %v741 = vunpack.c.l.b16 %v728
    %v742 = vunpack.c.l.b16 %v729
    %v743 = vunpack.c.l.b16 %v730
    %v744 = vpack.c.b16 %v741, %v740
    %v745 = vpack.c.b16 %v743, %v742
    %v749 = vsel %vm225, %v732, 0
    %751 = vmatpush.bf16.msra.mxu0 0
    %752 = vmatpush.bf16.msra.mxu0 0
    %753 = vmatpush.bf16.msra.mxu0 0
    %754 = vmatpush.bf16.msra.mxu0 0
    %755 = vmatpush.bf16.msra.mxu0 0
    %756 = vmatpush.bf16.msra.mxu0 0
    %757 = vmatpush.bf16.msra.mxu0 %v745
    %758 = vmatpush.bf16.msra.mxu0 %v744
    %759 = vmatmul.bf16.gmra.mxu0 %v749
    %v760 = vpop.f32.mrf.mxu0
    %v761 = vadd.f32 %v734, %v760
    %v762 = vpop.f32.mrf.mxu0
    %v763 = vadd.f32 %v734, %v762
    %764 = vdwg.mxu0
    %v765 = vmul.f32 %v761, %v761
    %v766 = vmul.f32 %v763, %v763
    %v767 = vmul.f32 %v761, 0.7978846
    %v768 = vmul.f32 %v763, 0.7978846
    %v769 = vmul.f32 %v765, 0.044715
    %v770 = vmul.f32 %v766, 0.044715
    %v771 = vadd.f32 %v769, 1.0
    %v772 = vadd.f32 %v770, 1.0
    %v773 = vmul.f32 %v767, %v771
    %v774 = vmul.f32 %v768, %v772
    %v775 = vtanh.pop %v773
    %v776 = vtanh.pop %v774
    %v777 = vmul.f32 %v775, 0.5
    %v778 = vmul.f32 %v776, 0.5
    %v779 = vadd.f32 %v777, 0.5
    %v780 = vadd.f32 %v778, 0.5
    %v781 = vmul.f32 %v761, %v779
    %v782 = vmul.f32 %v763, %v780
    %v783 = vld [vmem:[%s14] sm:$0xf]
    %v784 = vld [vmem:[%s14 + $0x4] sm:$0xf]
    %v785 = vld [vmem:[%s14 + $0x8] sm:$0xf]
    %v786 = vld [vmem:[%s14 + $0xc] sm:$0xf]
    %v787 = vld [vmem:[%s14 + $0x10] sm:$0xf]
    %v788 = vld [vmem:[%s14 + $0x14] sm:$0xf]
    %v789 = vld [vmem:[%s14 + $0x18] sm:$0xf]
    %v790 = vld [vmem:[%s14 + $0x1c] sm:$0xf]
    %v791 = vld [vmem:[%s14 + $0x20] sm:$0xf]
    %v792 = vld [vmem:[%s14 + $0x24] sm:$0xf]
    %v793 = vld [vmem:[%s14 + $0x28] sm:$0xf]
    %v794 = vld [vmem:[%s14 + $0x2c] sm:$0xf]
    %v795 = vld [vmem:[%s14 + $0x30] sm:$0xf]
    %v796 = vld [vmem:[%s14 + $0x34] sm:$0xf]
    %v797 = vld [vmem:[%s14 + $0x38] sm:$0xf]
    %v798 = vld [vmem:[%s14 + $0x3c] sm:$0xf]
    %v799 = vld [vmem:[%s15] sm:$0x1]
    %v800 = vpack.c.bf16 %v782, %v781
    %v802 = vperm.slane %v799, 0
    %v820 = vunpack.c.l.b16 %v783
    %v821 = vunpack.c.l.b16 %v784
    %v822 = vunpack.c.l.b16 %v785
    %v823 = vunpack.c.l.b16 %v786
    %v824 = vunpack.c.l.b16 %v787
    %v825 = vunpack.c.l.b16 %v788
    %v826 = vunpack.c.l.b16 %v789
    %v827 = vunpack.c.l.b16 %v790
    %v828 = vunpack.c.l.b16 %v791
    %v829 = vunpack.c.l.b16 %v792
    %v830 = vunpack.c.l.b16 %v793
    %v831 = vunpack.c.l.b16 %v794
    %v832 = vunpack.c.l.b16 %v795
    %v833 = vunpack.c.l.b16 %v796
    %v834 = vunpack.c.l.b16 %v797
    %v835 = vunpack.c.l.b16 %v798
    %v836 = vpack.c.b16 %v821, %v820
    %v837 = vpack.c.b16 %v823, %v822
    %v838 = vpack.c.b16 %v825, %v824
    %v839 = vpack.c.b16 %v827, %v826
    %v840 = vpack.c.b16 %v829, %v828
    %v841 = vpack.c.b16 %v831, %v830
    %v842 = vpack.c.b16 %v833, %v832
    %v843 = vpack.c.b16 %v835, %v834
    %852 = vmatpush.bf16.msra.mxu0 %v843
    %853 = vmatpush.bf16.msra.mxu0 %v842
    %854 = vmatpush.bf16.msra.mxu0 %v841
    %855 = vmatpush.bf16.msra.mxu0 %v840
    %856 = vmatpush.bf16.msra.mxu0 %v839
    %857 = vmatpush.bf16.msra.mxu0 %v838
    %858 = vmatpush.bf16.msra.mxu0 %v837
    %859 = vmatpush.bf16.msra.mxu0 %v836
    %860 = vmatmul.bf16.gmra.mxu0 %v800
    %v861 = vpop.f32.mrf.mxu0
    %v862 = vadd.f32 %v802, %v861
    %v863 = vpop.f32.mrf.mxu0
    %v864 = vadd.f32 %v802, %v863
    %865 = vdwg.mxu0
    %v866 = vadd.f32 %v669, %v862
    %v867 = vadd.f32 %v670, %v864
    %s868 = scalar_lea.vmem %s4, 1
    %v869 = vld [vmem:[%s868] sm:$0x1]
    %s870 = scalar_lea.vmem %s5, 1
    %v871 = vld [vmem:[%s870] sm:$0x1]
    %v872 = vsel %vm225, %v866, 0.0
    %873 = vadd.xlane.f32.xlu0 %v872
    %v874 = vpop.xlane.xlu0 %873
    %v875 = vsel %vm225, %v867, 0.0
    %876 = vadd.xlane.f32.xlu0 %v875
    %v877 = vpop.xlane.xlu0 %876
    %v878 = vmul.f32 %v874, %v238
    %v879 = vmul.f32 %v877, %v238
    %v880 = vsub.f32 %v866, %v878
    %v881 = vsub.f32 %v867, %v879
    %v882 = vmul.f32 %v880, %v880
    %v883 = vmul.f32 %v881, %v881
    %v884 = vsel %vm225, %v882, 0.0
    %885 = vadd.xlane.f32.xlu0 %v884
    %v886 = vpop.xlane.xlu0 %885
    %v887 = vsel %vm225, %v883, 0.0
    %888 = vadd.xlane.f32.xlu0 %v887
    %v889 = vpop.xlane.xlu0 %888
    %v890 = vmul.f32 %v886, %v238
    %v891 = vmul.f32 %v889, %v238
    %v892 = vadd.f32 %v890, 1e-06
    %v893 = vadd.f32 %v891, 1e-06
    %v894 = vrsqrt.pop %v892
    %v895 = vmul.f32 %v894, %v892
    %v896 = vmul.f32 %v895, %v894
    %v897 = vmul.f32 0.5, %v896
    %v898 = vsub.f32 1.5, %v897
    %v899 = vmul.f32 %v894, %v898
    %vm900 = vweird.f32 %v892
    %vm901 = vweird.f32 %v894
    %vm902 = vmor %vm900, %vm901
    %v903 = vsel %vm902, %v894, %v899
    %v904 = vrsqrt.pop %v893
    %v905 = vmul.f32 %v904, %v893
    %v906 = vmul.f32 %v905, %v904
    %v907 = vmul.f32 0.5, %v906
    %v908 = vsub.f32 1.5, %v907
    %v909 = vmul.f32 %v904, %v908
    %vm910 = vweird.f32 %v893
    %vm911 = vweird.f32 %v904
    %vm912 = vmor %vm910, %vm911
    %v913 = vsel %vm912, %v904, %v909
    %v914 = vmul.f32 %v880, %v903
    %v915 = vmul.f32 %v881, %v913
    %v917 = vperm.slane %v869, 0
    %v919 = vmul.f32 %v914, %v917
    %v920 = vmul.f32 %v915, %v917
    %v922 = vperm.slane %v871, 0
    %v924 = vadd.f32 %v919, %v922
    %v925 = vadd.f32 %v920, %v922
    %s926 = scalar_lea.vmem %s6, 16
    %v927 = vld [vmem:[%s926] sm:$0xf]
    %v928 = vld [vmem:[%s926 + $0x4] sm:$0xf]
    %v929 = vld [vmem:[%s926 + $0x8] sm:$0xf]
    %v930 = vld [vmem:[%s926 + $0xc] sm:$0xf]
    %s931 = scalar_lea.vmem %s7, 1
    %v932 = vld [vmem:[%s931] sm:$0x1]
    %v933 = vpack.c.bf16 %v925, %v924
    %v935 = vperm.slane %v932, 0
    %v941 = vunpack.c.l.b16 %v927
    %v942 = vunpack.c.l.b16 %v928
    %v943 = vunpack.c.l.b16 %v929
    %v944 = vunpack.c.l.b16 %v930
    %v945 = vpack.c.b16 %v942, %v941
    %v946 = vpack.c.b16 %v944, %v943
    %v950 = vsel %vm225, %v933, 0
    %952 = vmatpush.bf16.msra.mxu0 0
    %953 = vmatpush.bf16.msra.mxu0 0
    %954 = vmatpush.bf16.msra.mxu0 0
    %955 = vmatpush.bf16.msra.mxu0 0
    %956 = vmatpush.bf16.msra.mxu0 0
    %957 = vmatpush.bf16.msra.mxu0 0
    %958 = vmatpush.bf16.msra.mxu0 %v946
    %959 = vmatpush.bf16.msra.mxu0 %v945
    %960 = vmatmul.bf16.gmra.mxu0 %v950
    %v961 = vpop.f32.mrf.mxu0
    %v962 = vadd.f32 %v935, %v961
    %v963 = vpop.f32.mrf.mxu0
    %v964 = vadd.f32 %v935, %v963
    %965 = vdwg.mxu0
    %v966 = vpack.c.bf16 %v962, %v962
    %v967 = vpack.c.bf16 %v964, %v964
    %v970 = vunpack.c.l.b16 %v966
    %v971 = vunpack.c.l.b16 %v967
    %v972 = vpack.c.b16 %v971, %v970
    %973 = vrot.lane.b32.xlu0 %v972, 96
    %v974 = vpop.permute.xlu0 %973
    %v976 = vsel %vm334, %v972, 0
    %v979 = vsel %vm334, %v974, 0
    %981 = vmatpush.bf16.xpose.msra.mxu0 0
    %982 = vmatpush.bf16.xpose.msra.mxu0 0
    %983 = vmatpush.bf16.xpose.msra.mxu0 0
    %984 = vmatpush.bf16.xpose.msra.mxu0 0
    %985 = vmatpush.bf16.xpose.msra.mxu0 0
    %986 = vmatpush.bf16.xpose.msra.mxu0 0
    %987 = vmatpush.bf16.xpose.msra.mxu0 0
    %988 = vmatpush.bf16.xpose.msra.mxu0 %v979
    %989 = vmatmul.bf16.gmra.mxu0 %v976
    %v990 = vpop.f32.mrf.mxu0
    %v991 = vadd.f32 %v85, %v990
    %v992 = vpop.f32.mrf.mxu0
    %v993 = vadd.f32 %v86, %v992
    %994 = vdwg.mxu0
    %v995 = vsel %vm355, %v991, -inf
    %996 = vmax.xlane.f32.xlu0 %v995
    %v997 = vpop.xlane.xlu0 %996
    %v998 = vsel %vm355, %v993, -inf
    %999 = vmax.xlane.f32.xlu0 %v998
    %v1000 = vpop.xlane.xlu0 %999
    %v1001 = vsub.f32 %v991, %v997
    %v1002 = vsub.f32 %v993, %v1000
    %v1003 = vmul.f32 %v1001, 1.442695
    %v1004 = vpow.pop %v1003
    %v1005 = vmul.f32 %v1002, 1.442695
    %v1006 = vpow.pop %v1005
    %v1007 = vsel %vm355, %v1004, 0.0
    %1008 = vadd.xlane.f32.xlu0 %v1007
    %v1009 = vpop.xlane.xlu0 %1008
    %v1010 = vsel %vm355, %v1006, 0.0
    %1011 = vadd.xlane.f32.xlu0 %v1010
    %v1012 = vpop.xlane.xlu0 %1011
    %v1013 = vrcp.pop %v1009
    %v1014 = vrcp.pop %v1012
    %v1015 = vmul.f32 %v1004, %v1013
    %v1016 = vmul.f32 %v1006, %v1014
    %v1017 = vpack.c.bf16 %v1016, %v1015
    %1018 = vrot.lane.b32.xlu0 %v972, 64
    %v1019 = vpop.permute.xlu0 %1018
    %v1022 = vsel %vm355, %v1017, 0
    %1024 = vmatpush.bf16.msra.mxu0 0
    %1025 = vmatpush.bf16.msra.mxu0 0
    %1026 = vmatpush.bf16.msra.mxu0 0
    %1027 = vmatpush.bf16.msra.mxu0 0
    %1028 = vmatpush.bf16.msra.mxu0 0
    %1029 = vmatpush.bf16.msra.mxu0 0
    %1030 = vmatpush.bf16.msra.mxu0 0
    %1031 = vmatpush.bf16.msra.mxu0 %v1019
    %1032 = vmatmul.bf16.gmra.mxu0 %v1022
    %v1033 = vpop.f32.mrf.mxu0
    %v1034 = vadd.f32 0.0, %v1033
    %v1035 = vpop.f32.mrf.mxu0
    %v1036 = vadd.f32 0.0, %v1035
    %1037 = vdwg.mxu0
    %1038 = vrot.lane.b32.xlu0 %v972, 120
    %v1039 = vpop.permute.xlu0 %1038
    %1040 = vrot.lane.b32.xlu0 %v972, 88
    %v1041 = vpop.permute.xlu0 %1040
    %v1043 = vsel %vm334, %v1039, 0
    %v1046 = vsel %vm334, %v1041, 0
    %1048 = vmatpush.bf16.xpose.msra.mxu0 0
    %1049 = vmatpush.bf16.xpose.msra.mxu0 0
    %1050 = vmatpush.bf16.xpose.msra.mxu0 0
    %1051 = vmatpush.bf16.xpose.msra.mxu0 0
    %1052 = vmatpush.bf16.xpose.msra.mxu0 0
    %1053 = vmatpush.bf16.xpose.msra.mxu0 0
    %1054 = vmatpush.bf16.xpose.msra.mxu0 0
    %1055 = vmatpush.bf16.xpose.msra.mxu0 %v1046
    %1056 = vmatmul.bf16.gmra.mxu0 %v1043
    %v1057 = vpop.f32.mrf.mxu0
    %v1058 = vadd.f32 %v85, %v1057
    %v1059 = vpop.f32.mrf.mxu0
    %v1060 = vadd.f32 %v86, %v1059
    %1061 = vdwg.mxu0
    %v1062 = vsel %vm355, %v1058, -inf
    %1063 = vmax.xlane.f32.xlu0 %v1062
    %v1064 = vpop.xlane.xlu0 %1063
    %v1065 = vsel %vm355, %v1060, -inf
    %1066 = vmax.xlane.f32.xlu0 %v1065
    %v1067 = vpop.xlane.xlu0 %1066
    %v1068 = vsub.f32 %v1058, %v1064
    %v1069 = vsub.f32 %v1060, %v1067
    %v1070 = vmul.f32 %v1068, 1.442695
    %v1071 = vpow.pop %v1070
    %v1072 = vmul.f32 %v1069, 1.442695
    %v1073 = vpow.pop %v1072
    %v1074 = vsel %vm355, %v1071, 0.0
    %1075 = vadd.xlane.f32.xlu0 %v1074
    %v1076 = vpop.xlane.xlu0 %1075
    %v1077 = vsel %vm355, %v1073, 0.0
    %1078 = vadd.xlane.f32.xlu0 %v1077
    %v1079 = vpop.xlane.xlu0 %1078
    %v1080 = vrcp.pop %v1076
    %v1081 = vrcp.pop %v1079
    %v1082 = vmul.f32 %v1071, %v1080
    %v1083 = vmul.f32 %v1073, %v1081
    %v1084 = vpack.c.bf16 %v1083, %v1082
    %1085 = vrot.lane.b32.xlu0 %v972, 56
    %v1086 = vpop.permute.xlu0 %1085
    %v1089 = vsel %vm355, %v1084, 0
    %1091 = vmatpush.bf16.msra.mxu0 0
    %1092 = vmatpush.bf16.msra.mxu0 0
    %1093 = vmatpush.bf16.msra.mxu0 0
    %1094 = vmatpush.bf16.msra.mxu0 0
    %1095 = vmatpush.bf16.msra.mxu0 0
    %1096 = vmatpush.bf16.msra.mxu0 0
    %1097 = vmatpush.bf16.msra.mxu0 0
    %1098 = vmatpush.bf16.msra.mxu0 %v1086
    %1099 = vmatmul.bf16.gmra.mxu0 %v1089
    %v1100 = vpop.f32.mrf.mxu0
    %v1101 = vadd.f32 0.0, %v1100
    %v1102 = vpop.f32.mrf.mxu0
    %v1103 = vadd.f32 0.0, %v1102
    %1104 = vdwg.mxu0
    %1105 = vrot.lane.b32.xlu0 %v972, 112
    %v1106 = vpop.permute.xlu0 %1105
    %1107 = vrot.lane.b32.xlu0 %v972, 80
    %v1108 = vpop.permute.xlu0 %1107
    %v1110 = vsel %vm334, %v1106, 0
    %v1113 = vsel %vm334, %v1108, 0
    %1115 = vmatpush.bf16.xpose.msra.mxu0 0
    %1116 = vmatpush.bf16.xpose.msra.mxu0 0
    %1117 = vmatpush.bf16.xpose.msra.mxu0 0
    %1118 = vmatpush.bf16.xpose.msra.mxu0 0
    %1119 = vmatpush.bf16.xpose.msra.mxu0 0
    %1120 = vmatpush.bf16.xpose.msra.mxu0 0
    %1121 = vmatpush.bf16.xpose.msra.mxu0 0
    %1122 = vmatpush.bf16.xpose.msra.mxu0 %v1113
    %1123 = vmatmul.bf16.gmra.mxu0 %v1110
    %v1124 = vpop.f32.mrf.mxu0
    %v1125 = vadd.f32 %v85, %v1124
    %v1126 = vpop.f32.mrf.mxu0
    %v1127 = vadd.f32 %v86, %v1126
    %1128 = vdwg.mxu0
    %v1129 = vsel %vm355, %v1125, -inf
    %1130 = vmax.xlane.f32.xlu0 %v1129
    %v1131 = vpop.xlane.xlu0 %1130
    %v1132 = vsel %vm355, %v1127, -inf
    %1133 = vmax.xlane.f32.xlu0 %v1132
    %v1134 = vpop.xlane.xlu0 %1133
    %v1135 = vsub.f32 %v1125, %v1131
    %v1136 = vsub.f32 %v1127, %v1134
    %v1137 = vmul.f32 %v1135, 1.442695
    %v1138 = vpow.pop %v1137
    %v1139 = vmul.f32 %v1136, 1.442695
    %v1140 = vpow.pop %v1139
    %v1141 = vsel %vm355, %v1138, 0.0
    %1142 = vadd.xlane.f32.xlu0 %v1141
    %v1143 = vpop.xlane.xlu0 %1142
    %v1144 = vsel %vm355, %v1140, 0.0
    %1145 = vadd.xlane.f32.xlu0 %v1144
    %v1146 = vpop.xlane.xlu0 %1145
    %v1147 = vrcp.pop %v1143
    %v1148 = vrcp.pop %v1146
    %v1149 = vmul.f32 %v1138, %v1147
    %v1150 = vmul.f32 %v1140, %v1148
    %v1151 = vpack.c.bf16 %v1150, %v1149
    %1152 = vrot.lane.b32.xlu0 %v972, 48
    %v1153 = vpop.permute.xlu0 %1152
    %v1156 = vsel %vm355, %v1151, 0
    %1158 = vmatpush.bf16.msra.mxu0 0
    %1159 = vmatpush.bf16.msra.mxu0 0
    %1160 = vmatpush.bf16.msra.mxu0 0
    %1161 = vmatpush.bf16.msra.mxu0 0
    %1162 = vmatpush.bf16.msra.mxu0 0
    %1163 = vmatpush.bf16.msra.mxu0 0
    %1164 = vmatpush.bf16.msra.mxu0 0
    %1165 = vmatpush.bf16.msra.mxu0 %v1153
    %1166 = vmatmul.bf16.gmra.mxu0 %v1156
    %v1167 = vpop.f32.mrf.mxu0
    %v1168 = vadd.f32 0.0, %v1167
    %v1169 = vpop.f32.mrf.mxu0
    %v1170 = vadd.f32 0.0, %v1169
    %1171 = vdwg.mxu0
    %1172 = vrot.lane.b32.xlu0 %v972, 104
    %v1173 = vpop.permute.xlu0 %1172
    %1174 = vrot.lane.b32.xlu0 %v972, 72
    %v1175 = vpop.permute.xlu0 %1174
    %v1177 = vsel %vm334, %v1173, 0
    %v1180 = vsel %vm334, %v1175, 0
    %1182 = vmatpush.bf16.xpose.msra.mxu0 0
    %1183 = vmatpush.bf16.xpose.msra.mxu0 0
    %1184 = vmatpush.bf16.xpose.msra.mxu0 0
    %1185 = vmatpush.bf16.xpose.msra.mxu0 0
    %1186 = vmatpush.bf16.xpose.msra.mxu0 0
    %1187 = vmatpush.bf16.xpose.msra.mxu0 0
    %1188 = vmatpush.bf16.xpose.msra.mxu0 0
    %1189 = vmatpush.bf16.xpose.msra.mxu0 %v1180
    %1190 = vmatmul.bf16.gmra.mxu0 %v1177
    %v1191 = vpop.f32.mrf.mxu0
    %v1192 = vadd.f32 %v85, %v1191
    %v1193 = vpop.f32.mrf.mxu0
    %v1194 = vadd.f32 %v86, %v1193
    %1195 = vdwg.mxu0
    %v1196 = vsel %vm355, %v1192, -inf
    %1197 = vmax.xlane.f32.xlu0 %v1196
    %v1198 = vpop.xlane.xlu0 %1197
    %v1199 = vsel %vm355, %v1194, -inf
    %1200 = vmax.xlane.f32.xlu0 %v1199
    %v1201 = vpop.xlane.xlu0 %1200
    %v1202 = vsub.f32 %v1192, %v1198
    %v1203 = vsub.f32 %v1194, %v1201
    %v1204 = vmul.f32 %v1202, 1.442695
    %v1205 = vpow.pop %v1204
    %v1206 = vmul.f32 %v1203, 1.442695
    %v1207 = vpow.pop %v1206
    %v1208 = vsel %vm355, %v1205, 0.0
    %1209 = vadd.xlane.f32.xlu0 %v1208
    %v1210 = vpop.xlane.xlu0 %1209
    %v1211 = vsel %vm355, %v1207, 0.0
    %1212 = vadd.xlane.f32.xlu0 %v1211
    %v1213 = vpop.xlane.xlu0 %1212
    %v1214 = vrcp.pop %v1210
    %v1215 = vrcp.pop %v1213
    %v1216 = vmul.f32 %v1205, %v1214
    %v1217 = vmul.f32 %v1207, %v1215
    %v1218 = vpack.c.bf16 %v1217, %v1216
    %1219 = vrot.lane.b32.xlu0 %v972, 40
    %v1220 = vpop.permute.xlu0 %1219
    %v1223 = vsel %vm355, %v1218, 0
    %1225 = vmatpush.bf16.msra.mxu0 0
    %1226 = vmatpush.bf16.msra.mxu0 0
    %1227 = vmatpush.bf16.msra.mxu0 0
    %1228 = vmatpush.bf16.msra.mxu0 0
    %1229 = vmatpush.bf16.msra.mxu0 0
    %1230 = vmatpush.bf16.msra.mxu0 0
    %1231 = vmatpush.bf16.msra.mxu0 0
    %1232 = vmatpush.bf16.msra.mxu0 %v1220
    %1233 = vmatmul.bf16.gmra.mxu0 %v1223
    %v1234 = vpop.f32.mrf.mxu0
    %v1235 = vadd.f32 0.0, %v1234
    %v1236 = vpop.f32.mrf.mxu0
    %v1237 = vadd.f32 0.0, %v1236
    %1238 = vdwg.mxu0
    %1241 = vrot.lane.b32.xlu0 %v1101, 8
    %v1242 = vpop.permute.xlu0 %1241
    %1243 = vrot.lane.b32.xlu0 %v1103, 8
    %v1244 = vpop.permute.xlu0 %1243
    %1249 = vrot.lane.b32.xlu0 %v1168, 16
    %v1250 = vpop.permute.xlu0 %1249
    %1251 = vrot.lane.b32.xlu0 %v1170, 16
    %v1252 = vpop.permute.xlu0 %1251
    %1257 = vrot.lane.b32.xlu0 %v1235, 24
    %v1258 = vpop.permute.xlu0 %1257
    %1259 = vrot.lane.b32.xlu0 %v1237, 24
    %v1260 = vpop.permute.xlu0 %1259
    %v1263 = vsel %vm334, %v1034, %v1242
    %v1264 = vsel %vm334, %v1036, %v1244
    %v1265 = vsel %vm355, %v1263, %v1250
    %v1266 = vsel %vm355, %v1264, %v1252
    %v1267 = vsel %vm628, %v1265, %v1258
    %v1268 = vsel %vm628, %v1266, %v1260
    %s1269 = scalar_lea.vmem %s8, 16
    %v1270 = vld [vmem:[%s1269] sm:$0xf]
    %v1271 = vld [vmem:[%s1269 + $0x4] sm:$0xf]
    %v1272 = vld [vmem:[%s1269 + $0x8] sm:$0xf]
    %v1273 = vld [vmem:[%s1269 + $0xc] sm:$0xf]
    %s1274 = scalar_lea.vmem %s9, 1
    %v1275 = vld [vmem:[%s1274] sm:$0x1]
    %v1276 = vpack.c.bf16 %v1268, %v1267
    %v1278 = vperm.slane %v1275, 0
    %v1284 = vunpack.c.l.b16 %v1270
    %v1285 = vunpack.c.l.b16 %v1271
    %v1286 = vunpack.c.l.b16 %v1272
    %v1287 = vunpack.c.l.b16 %v1273
    %v1288 = vpack.c.b16 %v1285, %v1284
    %v1289 = vpack.c.b16 %v1287, %v1286
    %v1293 = vsel %vm225, %v1276, 0
    %1295 = vmatpush.bf16.msra.mxu0 0
    %1296 = vmatpush.bf16.msra.mxu0 0
    %1297 = vmatpush.bf16.msra.mxu0 0
    %1298 = vmatpush.bf16.msra.mxu0 0
    %1299 = vmatpush.bf16.msra.mxu0 0
    %1300 = vmatpush.bf16.msra.mxu0 0
    %1301 = vmatpush.bf16.msra.mxu0 %v1289
    %1302 = vmatpush.bf16.msra.mxu0 %v1288
    %1303 = vmatmul.bf16.gmra.mxu0 %v1293
    %v1304 = vpop.f32.mrf.mxu0
    %v1305 = vadd.f32 %v1278, %v1304
    %v1306 = vpop.f32.mrf.mxu0
    %v1307 = vadd.f32 %v1278, %v1306
    %1308 = vdwg.mxu0
    %v1309 = vadd.f32 %v866, %v1305
    %v1310 = vadd.f32 %v867, %v1307
    %s1311 = scalar_lea.vmem %s10, 1
    %v1312 = vld [vmem:[%s1311] sm:$0x1]
    %s1313 = scalar_lea.vmem %s11, 1
    %v1314 = vld [vmem:[%s1313] sm:$0x1]
    %v1315 = vsel %vm225, %v1309, 0.0
    %1316 = vadd.xlane.f32.xlu0 %v1315
    %v1317 = vpop.xlane.xlu0 %1316
    %v1318 = vsel %vm225, %v1310, 0.0
    %1319 = vadd.xlane.f32.xlu0 %v1318
    %v1320 = vpop.xlane.xlu0 %1319
    %v1321 = vmul.f32 %v1317, %v238
    %v1322 = vmul.f32 %v1320, %v238
    %v1323 = vsub.f32 %v1309, %v1321
    %v1324 = vsub.f32 %v1310, %v1322
    %v1325 = vmul.f32 %v1323, %v1323
    %v1326 = vmul.f32 %v1324, %v1324
    %v1327 = vsel %vm225, %v1325, 0.0
    %1328 = vadd.xlane.f32.xlu0 %v1327
    %v1329 = vpop.xlane.xlu0 %1328
    %v1330 = vsel %vm225, %v1326, 0.0
    %1331 = vadd.xlane.f32.xlu0 %v1330
    %v1332 = vpop.xlane.xlu0 %1331
    %v1333 = vmul.f32 %v1329, %v238
    %v1334 = vmul.f32 %v1332, %v238
    %v1335 = vadd.f32 %v1333, 1e-06
    %v1336 = vadd.f32 %v1334, 1e-06
    %v1337 = vrsqrt.pop %v1335
    %v1338 = vmul.f32 %v1337, %v1335
    %v1339 = vmul.f32 %v1338, %v1337
    %v1340 = vmul.f32 0.5, %v1339
    %v1341 = vsub.f32 1.5, %v1340
    %v1342 = vmul.f32 %v1337, %v1341
    %vm1343 = vweird.f32 %v1335
    %vm1344 = vweird.f32 %v1337
    %vm1345 = vmor %vm1343, %vm1344
    %v1346 = vsel %vm1345, %v1337, %v1342
    %v1347 = vrsqrt.pop %v1336
    %v1348 = vmul.f32 %v1347, %v1336
    %v1349 = vmul.f32 %v1348, %v1347
    %v1350 = vmul.f32 0.5, %v1349
    %v1351 = vsub.f32 1.5, %v1350
    %v1352 = vmul.f32 %v1347, %v1351
    %vm1353 = vweird.f32 %v1336
    %vm1354 = vweird.f32 %v1347
    %vm1355 = vmor %vm1353, %vm1354
    %v1356 = vsel %vm1355, %v1347, %v1352
    %v1357 = vmul.f32 %v1323, %v1346
    %v1358 = vmul.f32 %v1324, %v1356
    %v1360 = vperm.slane %v1312, 0
    %v1362 = vmul.f32 %v1357, %v1360
    %v1363 = vmul.f32 %v1358, %v1360
    %v1365 = vperm.slane %v1314, 0
    %v1367 = vadd.f32 %v1362, %v1365
    %v1368 = vadd.f32 %v1363, %v1365
    %s1369 = scalar_lea.vmem %s12, 16
    %v1370 = vld [vmem:[%s1369] sm:$0xf]
    %v1371 = vld [vmem:[%s1369 + $0x4] sm:$0xf]
    %v1372 = vld [vmem:[%s1369 + $0x8] sm:$0xf]
    %v1373 = vld [vmem:[%s1369 + $0xc] sm:$0xf]
    %s1374 = scalar_lea.vmem %s13, 1
    %v1375 = vld [vmem:[%s1374] sm:$0x1]
    %v1376 = vpack.c.bf16 %v1368, %v1367
    %v1378 = vperm.slane %v1375, 0
    %v1384 = vunpack.c.l.b16 %v1370
    %v1385 = vunpack.c.l.b16 %v1371
    %v1386 = vunpack.c.l.b16 %v1372
    %v1387 = vunpack.c.l.b16 %v1373
    %v1388 = vpack.c.b16 %v1385, %v1384
    %v1389 = vpack.c.b16 %v1387, %v1386
    %v1393 = vsel %vm225, %v1376, 0
    %1395 = vmatpush.bf16.msra.mxu0 0
    %1396 = vmatpush.bf16.msra.mxu0 0
    %1397 = vmatpush.bf16.msra.mxu0 0
    %1398 = vmatpush.bf16.msra.mxu0 0
    %1399 = vmatpush.bf16.msra.mxu0 0
    %1400 = vmatpush.bf16.msra.mxu0 0
    %1401 = vmatpush.bf16.msra.mxu0 %v1389
    %1402 = vmatpush.bf16.msra.mxu0 %v1388
    %1403 = vmatmul.bf16.gmra.mxu0 %v1393
    %v1404 = vpop.f32.mrf.mxu0
    %v1405 = vadd.f32 %v1378, %v1404
    %v1406 = vpop.f32.mrf.mxu0
    %v1407 = vadd.f32 %v1378, %v1406
    %1408 = vdwg.mxu0
    %v1409 = vmul.f32 %v1405, %v1405
    %v1410 = vmul.f32 %v1407, %v1407
    %v1411 = vmul.f32 %v1405, 0.7978846
    %v1412 = vmul.f32 %v1407, 0.7978846
    %v1413 = vmul.f32 %v1409, 0.044715
    %v1414 = vmul.f32 %v1410, 0.044715
    %v1415 = vadd.f32 %v1413, 1.0
    %v1416 = vadd.f32 %v1414, 1.0
    %v1417 = vmul.f32 %v1411, %v1415
    %v1418 = vmul.f32 %v1412, %v1416
    %v1419 = vtanh.pop %v1417
    %v1420 = vtanh.pop %v1418
    %v1421 = vmul.f32 %v1419, 0.5
    %v1422 = vmul.f32 %v1420, 0.5
    %v1423 = vadd.f32 %v1421, 0.5
    %v1424 = vadd.f32 %v1422, 0.5
    %v1425 = vmul.f32 %v1405, %v1423
    %v1426 = vmul.f32 %v1407, %v1424
    %s1427 = scalar_lea.vmem %s14, 64
    %v1428 = vld [vmem:[%s1427] sm:$0xf]
    %v1429 = vld [vmem:[%s1427 + $0x4] sm:$0xf]
    %v1430 = vld [vmem:[%s1427 + $0x8] sm:$0xf]
    %v1431 = vld [vmem:[%s1427 + $0xc] sm:$0xf]
    %v1432 = vld [vmem:[%s1427 + $0x10] sm:$0xf]
    %v1433 = vld [vmem:[%s1427 + $0x14] sm:$0xf]
    %v1434 = vld [vmem:[%s1427 + $0x18] sm:$0xf]
    %v1435 = vld [vmem:[%s1427 + $0x1c] sm:$0xf]
    %v1436 = vld [vmem:[%s1427 + $0x20] sm:$0xf]
    %v1437 = vld [vmem:[%s1427 + $0x24] sm:$0xf]
    %v1438 = vld [vmem:[%s1427 + $0x28] sm:$0xf]
    %v1439 = vld [vmem:[%s1427 + $0x2c] sm:$0xf]
    %v1440 = vld [vmem:[%s1427 + $0x30] sm:$0xf]
    %v1441 = vld [vmem:[%s1427 + $0x34] sm:$0xf]
    %v1442 = vld [vmem:[%s1427 + $0x38] sm:$0xf]
    %v1443 = vld [vmem:[%s1427 + $0x3c] sm:$0xf]
    %s1444 = scalar_lea.vmem %s15, 1
    %v1445 = vld [vmem:[%s1444] sm:$0x1]
    %v1446 = vpack.c.bf16 %v1426, %v1425
    %v1448 = vperm.slane %v1445, 0
    %v1466 = vunpack.c.l.b16 %v1428
    %v1467 = vunpack.c.l.b16 %v1429
    %v1468 = vunpack.c.l.b16 %v1430
    %v1469 = vunpack.c.l.b16 %v1431
    %v1470 = vunpack.c.l.b16 %v1432
    %v1471 = vunpack.c.l.b16 %v1433
    %v1472 = vunpack.c.l.b16 %v1434
    %v1473 = vunpack.c.l.b16 %v1435
    %v1474 = vunpack.c.l.b16 %v1436
    %v1475 = vunpack.c.l.b16 %v1437
    %v1476 = vunpack.c.l.b16 %v1438
    %v1477 = vunpack.c.l.b16 %v1439
    %v1478 = vunpack.c.l.b16 %v1440
    %v1479 = vunpack.c.l.b16 %v1441
    %v1480 = vunpack.c.l.b16 %v1442
    %v1481 = vunpack.c.l.b16 %v1443
    %v1482 = vpack.c.b16 %v1467, %v1466
    %v1483 = vpack.c.b16 %v1469, %v1468
    %v1484 = vpack.c.b16 %v1471, %v1470
    %v1485 = vpack.c.b16 %v1473, %v1472
    %v1486 = vpack.c.b16 %v1475, %v1474
    %v1487 = vpack.c.b16 %v1477, %v1476
    %v1488 = vpack.c.b16 %v1479, %v1478
    %v1489 = vpack.c.b16 %v1481, %v1480
    %1498 = vmatpush.bf16.msra.mxu0 %v1489
    %1499 = vmatpush.bf16.msra.mxu0 %v1488
    %1500 = vmatpush.bf16.msra.mxu0 %v1487
    %1501 = vmatpush.bf16.msra.mxu0 %v1486
    %1502 = vmatpush.bf16.msra.mxu0 %v1485
    %1503 = vmatpush.bf16.msra.mxu0 %v1484
    %1504 = vmatpush.bf16.msra.mxu0 %v1483
    %1505 = vmatpush.bf16.msra.mxu0 %v1482
    %1506 = vmatmul.bf16.gmra.mxu0 %v1446
    %v1507 = vpop.f32.mrf.mxu0
    %v1508 = vadd.f32 %v1448, %v1507
    %v1509 = vpop.f32.mrf.mxu0
    %v1510 = vadd.f32 %v1448, %v1509
    %1511 = vdwg.mxu0
    %v1512 = vadd.f32 %v1309, %v1508
    %v1513 = vadd.f32 %v1310, %v1510
    %v1515 = vrot.slane %v1513, 7
    %vm1517 = vcmask 1040384
    %v1518 = vsel %vm1517, %v1512, %v1515
    %v1519 = vld [vmem:[%s16] sm:$0x1]
    %v1520 = vld [vmem:[%s17] sm:$0x1]
    %vm1521 = vcmask 254976
    %v1522 = vsel %vm1521, %v1518, 0.0
    %1523 = vadd.xlane.f32.xlu0 %v1522
    %v1524 = vpop.xlane.xlu0 %1523
    %v1525 = vmul.f32 %v1524, %v238
    %v1526 = vsub.f32 %v1518, %v1525
    %v1527 = vmul.f32 %v1526, %v1526
    %v1528 = vsel %vm1521, %v1527, 0.0
    %1529 = vadd.xlane.f32.xlu0 %v1528
    %v1530 = vpop.xlane.xlu0 %1529
    %v1531 = vmul.f32 %v1530, %v238
    %v1532 = vadd.f32 %v1531, 1e-06
    %v1533 = vrsqrt.pop %v1532
    %v1534 = vmul.f32 %v1533, %v1532
    %v1535 = vmul.f32 %v1534, %v1533
    %v1536 = vmul.f32 0.5, %v1535
    %v1537 = vsub.f32 1.5, %v1536
    %v1538 = vmul.f32 %v1533, %v1537
    %vm1539 = vweird.f32 %v1532
    %vm1540 = vweird.f32 %v1533
    %vm1541 = vmor %vm1539, %vm1540
    %v1542 = vsel %vm1541, %v1533, %v1538
    %v1543 = vmul.f32 %v1526, %v1542
    %v1545 = vperm.slane %v1519, 0
    %v1547 = vmul.f32 %v1543, %v1545
    %v1549 = vperm.slane %v1520, 0
    %v1551 = vadd.f32 %v1547, %v1549
    %v1552 = vld [vmem:[%s18] sm:$0xf]
    %v1553 = vld [vmem:[%s18 + $0x4] sm:$0xf]
    %v1554 = vld [vmem:[%s18 + $0x8] sm:$0xf]
    %v1555 = vld [vmem:[%s18 + $0xc] sm:$0xf]
    %v1556 = vld [vmem:[%s19] sm:$0x1]
    %v1557 = vpack.c.bf16 %v1551, %v1551
    %v1559 = vperm.slane %v1556, 0
    %v1565 = vunpack.c.l.b16 %v1552
    %v1566 = vunpack.c.l.b16 %v1553
    %v1567 = vunpack.c.l.b16 %v1554
    %v1568 = vunpack.c.l.b16 %v1555
    %v1569 = vpack.c.b16 %v1566, %v1565
    %v1570 = vpack.c.b16 %v1568, %v1567
    %v1574 = vsel %vm225, %v1557, 0
    %1576 = vmatpush.bf16.msra.mxu0 0
    %1577 = vmatpush.bf16.msra.mxu0 0
    %1578 = vmatpush.bf16.msra.mxu0 0
    %1579 = vmatpush.bf16.msra.mxu0 0
    %1580 = vmatpush.bf16.msra.mxu0 0
    %1581 = vmatpush.bf16.msra.mxu0 0
    %1582 = vmatpush.bf16.msra.mxu0 %v1570
    %1583 = vmatpush.bf16.msra.mxu0 %v1569
    %1584 = vmatmul.bf16.gmra.mxu0 %v1574
    %v1585 = vpop.f32.mrf.mxu0
    %v1586 = vadd.f32 %v1559, %v1585
    %v1587 = vpop.f32.mrf.mxu0
    %1588 = vdwg.mxu0
    %v1589 = vld [vmem:[%s20] sm:$0xf]
    %v1590 = vld [vmem:[%s20 + $0x4] sm:$0xf]
    %v1591 = vld [vmem:[%s21] sm:$0x1]
    %v1592 = vpack.c.bf16 %v1586, %v1586
    %v1594 = vperm.slane %v1591, 0
    %v1598 = vunpack.c.l.b16 %v1589
    %v1599 = vunpack.c.l.b16 %v1590
    %v1600 = vpack.c.b16 %v1599, %v1598
    %v1603 = vsel %vm355, %v1592, 0
    %1605 = vmatpush.bf16.msra.mxu0 0
    %1606 = vmatpush.bf16.msra.mxu0 0
    %1607 = vmatpush.bf16.msra.mxu0 0
    %1608 = vmatpush.bf16.msra.mxu0 0
    %1609 = vmatpush.bf16.msra.mxu0 0
    %1610 = vmatpush.bf16.msra.mxu0 0
    %1611 = vmatpush.bf16.msra.mxu0 0
    %1612 = vmatpush.bf16.msra.mxu0 %v1600
    %1613 = vmatmul.bf16.gmra.mxu0 %v1603
    %v1614 = vpop.f32.mrf.mxu0
    %v1615 = vadd.f32 %v1594, %v1614
    %v1616 = vpop.f32.mrf.mxu0
    %1617 = vdwg.mxu0
    %v1618 = vmul.f32 %v1615, %v1615
    %v1619 = vmul.f32 %v1615, 0.7978846
    %v1620 = vmul.f32 %v1618, 0.044715
    %v1621 = vadd.f32 %v1620, 1.0
    %v1622 = vmul.f32 %v1619, %v1621
    %v1623 = vtanh.pop %v1622
    %v1624 = vmul.f32 %v1623, 0.5
    %v1625 = vadd.f32 %v1624, 0.5
    %v1626 = vmul.f32 %v1615, %v1625
    %v1627 = vld [vmem:[%s24] sm:$0x1]
    %v1629 = vperm.slane %v1627, 0
    %v1631 = vsub.f32 %v1626, %v1629
    %v1632 = vld [vmem:[%s25] sm:$0x1]
    %v1633 = vadd.f32 %v1632, 1e-05
    %v1634 = vrsqrt.pop %v1633
    %v1635 = vmul.f32 %v1634, %v1633
    %v1636 = vmul.f32 %v1635, %v1634
    %v1637 = vmul.f32 0.5, %v1636
    %v1638 = vsub.f32 1.5, %v1637
    %v1639 = vmul.f32 %v1634, %v1638
    %vm1640 = vweird.f32 %v1633
    %vm1641 = vweird.f32 %v1634
    %vm1642 = vmor %vm1640, %vm1641
    %v1643 = vsel %vm1642, %v1634, %v1639
    %v1645 = vperm.slane %v1643, 0
    %v1647 = vmul.f32 %v1631, %v1645
    %v1648 = vld [vmem:[%s22] sm:$0x1]
    %v1650 = vperm.slane %v1648, 0
    %v1652 = vmul.f32 %v1647, %v1650
    %v1653 = vld [vmem:[%s23] sm:$0x1]
    %v1655 = vperm.slane %v1653, 0
    %v1657 = vadd.f32 %v1652, %v1655
    %1658 = vst.msk [vmem:[#allocation2] sm:$0x3] %vm1521, %v1657
    // Predicated region
    $region106: #{encoder_forward.1} parent=1 // pred_check
      _
    $region107: #{encoder_forward.1} parent=1 // pred_check_branch
      %1660 = sbr.rel (0) target = $region109
    $region108: #{encoder_forward.1} parent=1 // pred_region
      %1662 = vsyncadd [#allocation3], 0
      %s1664 = sshll.u32 [#allocation2], 4
      %s1665 = int_to_ptr.vmem [resolvable:$true] %s1664
      %s1666 = sshll.u32 %s26, 4
      %s1667 = int_to_ptr.hbm [resolvable:$true] %s1666
      %1669 = dma.vmem_to_hbm [thread:$0]  %s1665, 32, %s1667, [#allocation3]
    $region109: #{encoder_forward.1} parent=1 // pred_fallthru
      _
    // Predicated region
    $region110: #{encoder_forward.1} parent=1 // pred_check
      _
    $region111: #{encoder_forward.1} parent=1 // pred_check_branch
      %1671 = sbr.rel (0) target = $region113
    $region112: #{encoder_forward.1} parent=1 // pred_region
      %1673 = dma.done [#allocation3], 32
    $region113: #{encoder_forward.1} parent=1 // pred_fallthru
      _
    %1674 = vsyncpa [#allocation3], 1

</llo_original>
